<compile_context>
chip_gen: v7x
topology: tpu7x:2x2x1
jax: 0.10.0
libtpu: 0.0.40
codegen_flags: <defaults>
</compile_context>

<pallas_src>
import jax
import jax.numpy as jnp
import numpy as np
from jax.experimental import pallas as pl
from jax.experimental.pallas import tpu as pltpu

EPS = 1e-5     # PyTorch LayerNorm default eps
LANE = 128     # TPU lane width; feature dims padded to this


def _vmem():
    return pl.BlockSpec(memory_space=pltpu.MemorySpace.VMEM)


# --------------------------- single fused kernel -----------------------------
def make_fused_kernel(num_layers, num_heads, C, Cp, alpha):
    HCp = num_heads * Cp
    inv_c = 1.0 / float(C)
    one_minus_alpha = 1.0 - float(alpha)

    def layer_norm(y, g, b):
        # Padded feature columns of y are zero, so full-row sums equal sums over the
        # real C channels; divide by the real C. gamma/beta are zero in the padded
        # columns, so the output padding stays exactly zero.
        mu = jnp.sum(y, axis=-1, keepdims=True) * inv_c
        msq = jnp.sum(y * y, axis=-1, keepdims=True) * inv_c
        var = msq - mu * mu
        return (y - mu) * jax.lax.rsqrt(var + EPS) * g + b

    def kernel(x_ref, fc_w_ref, fc_b_ref, ln0_g_ref, ln0_b_ref,
               wqkv_ref, bqkv_ref, lng_ref, lnb_ref,
               blk_ref, mean_map_ref, o_ref):
        x = x_ref[...]                              # [N, Cp]
        Nf = jnp.float32(x.shape[0])
        blk = blk_ref[...]                          # [HCp, HCp] head block-diag ones
        mean_map = mean_map_ref[...]                # [HCp, Cp]  (alpha/H)*stacked I

        # ---- fcs[0] + LayerNorm + ReLU (dropout = identity) ----
        y = jnp.dot(x, fc_w_ref[...], preferred_element_type=jnp.float32) + fc_b_ref[...]
        h = jnp.maximum(layer_norm(y, ln0_g_ref[...], ln0_b_ref[...]), 0.0)

        # ---- num_layers x (TransConvLayer + alpha-residual + LayerNorm) ----
        for l in range(num_layers):                 # static unroll (small L)
            # fused QKV projection: one [N,Cp]x[Cp,3*HCp] MXU push
            qkv = jnp.dot(h, wqkv_ref[l], preferred_element_type=jnp.float32) + bqkv_ref[l]
            q = qkv[:, 0 * HCp:1 * HCp]
            k = qkv[:, 1 * HCp:2 * HCp]
            v = qkv[:, 2 * HCp:3 * HCp]

            # torch.norm(., p=2): global Frobenius norm (padding is zero -> exact)
            qn = q * jax.lax.rsqrt(jnp.sum(q * q))
            kn = k * jax.lax.rsqrt(jnp.sum(k * k))

            # per-head kvs = K_h^T V_h for all heads as one matmul, block-diag masked
            kvs = jax.lax.dot_general(kn, v, (((0,), (0,)), ((), ())),
                                      preferred_element_type=jnp.float32) * blk
            num = jnp.dot(qn, kvs, preferred_element_type=jnp.float32) + Nf * v

            ks_sum = jnp.sum(kn, axis=0, keepdims=True)                 # [1, HCp]
            # per-head normalizer broadcast back to [N, HCp] via the block mask
            norm = jnp.dot(qn * ks_sum, blk, preferred_element_type=jnp.float32) + Nf
            attn = num * pl.reciprocal(norm, approx=True)

            # head mean (alpha/H folded into mean_map) + residual + LayerNorm
            acc = jnp.dot(attn, mean_map, preferred_element_type=jnp.float32)  # [N, Cp]
            xr = acc + one_minus_alpha * h
            h = layer_norm(xr, lng_ref[l], lnb_ref[l])

        o_ref[...] = h

    return kernel


# ------------------------------ wrapper --------------------------------------
def trans_conv_forward(x, params, *, num_heads, alpha):
    N, C = x.shape
    Cp = ((C + LANE - 1) // LANE) * LANE
    HCp = num_heads * Cp
    L = len(params['layers'])

    def pad_feat(a):                 # [..., C] -> [..., Cp] zero padded
        return jnp.pad(a, [(0, 0)] * (a.ndim - 1) + [(0, Cp - C)])

    def pad_head_w(w):               # [C, H*C] -> [Cp, H*Cp] (per-head padding)
        w3 = w.reshape(C, num_heads, C)
        w3 = jnp.pad(w3, ((0, Cp - C), (0, 0), (0, Cp - C)))
        return w3.reshape(Cp, HCp)

    def pad_head_b(b):               # [1, H*C] -> [1, H*Cp]
        b3 = b.reshape(1, num_heads, C)
        b3 = jnp.pad(b3, ((0, 0), (0, 0), (0, Cp - C)))
        return b3.reshape(1, HCp)

    xp = pad_feat(x)
    fc_w = jnp.pad(params['fc_w'], ((0, Cp - C), (0, Cp - C)))
    fc_b = pad_feat(params['fc_b'])
    ln0_g = pad_feat(params['ln0_g'])        # padded gamma = 0 keeps padding zeroed
    ln0_b = pad_feat(params['ln0_b'])

    wqkv = jnp.stack([jnp.concatenate(
        [pad_head_w(lp['wq']), pad_head_w(lp['wk']), pad_head_w(lp['wv'])], axis=1)
        for lp in params['layers']], axis=0)                     # [L, Cp, 3*HCp]
    bqkv = jnp.stack([jnp.concatenate(
        [pad_head_b(lp['bq']), pad_head_b(lp['bk']), pad_head_b(lp['bv'])], axis=1)
        for lp in params['layers']], axis=0)                     # [L, 1, 3*HCp]
    lng = jnp.stack([pad_feat(lp['ln_g']) for lp in params['layers']], axis=0)
    lnb = jnp.stack([pad_feat(lp['ln_b']) for lp in params['layers']], axis=0)

    ii = np.arange(HCp)
    blk = jnp.asarray(((ii[:, None] // Cp) == (ii[None, :] // Cp)).astype(np.float32))
    mean_map = jnp.asarray(
        np.tile(np.eye(Cp, dtype=np.float32), (num_heads, 1)) * (alpha / num_heads))

    kernel = make_fused_kernel(L, num_heads, C, Cp, alpha)
    args = (xp, fc_w, fc_b, ln0_g, ln0_b, wqkv, bqkv, lng, lnb, blk, mean_map)

    flops = (2 * N * Cp * Cp
             + L * (2 * N * Cp * 3 * HCp + 3 * 2 * N * HCp * HCp + 2 * N * HCp * Cp))
    transcendentals = N * Cp * (1 + L) + L * (N * HCp + 2)
    bytes_accessed = sum(int(np.prod(a.shape)) * 4 for a in args) + N * Cp * 4

    out = pl.pallas_call(
        kernel,
        out_shape=jax.ShapeDtypeStruct((N, Cp), jnp.float32),
        in_specs=[_vmem()] * len(args),
        out_specs=_vmem(),
        compiler_params=pltpu.CompilerParams(vmem_limit_bytes=32 * 1024 * 1024),
        cost_estimate=pl.CostEstimate(flops=flops,
                                      transcendentals=transcendentals,
                                      bytes_accessed=bytes_accessed),
    )(*args)
    return out[:, :C]


# ------------------------ deterministic parameter init -----------------------
def init_params(key, C, num_layers, num_heads):
    HC = num_heads * C

    def lin(k, fan_in, shape_w, shape_b):
        kw, kb = jax.random.split(k)
        bound = 1.0 / np.sqrt(fan_in)
        w = jax.random.uniform(kw, shape_w, jnp.float32, -bound, bound)
        b = jax.random.uniform(kb, shape_b, jnp.float32, -bound, bound)
        return w, b

    keys = jax.random.split(key, 1 + num_layers)
    fc_w, fc_b = lin(keys[0], C, (C, C), (1, C))
    params = {
        'fc_w': fc_w, 'fc_b': fc_b,
        'ln0_g': jnp.ones((1, C), jnp.float32),
        'ln0_b': jnp.zeros((1, C), jnp.float32),
        'layers': [],
    }
    for i in range(num_layers):
        kq, kk, kv = jax.random.split(keys[1 + i], 3)
        wq, bq = lin(kq, C, (C, HC), (1, HC))
        wk, bk = lin(kk, C, (C, HC), (1, HC))
        wv, bv = lin(kv, C, (C, HC), (1, HC))
        params['layers'].append({
            'wq': wq, 'bq': bq, 'wk': wk, 'bk': bk, 'wv': wv, 'bv': bv,
            'ln_g': jnp.ones((1, C), jnp.float32),
            'ln_b': jnp.zeros((1, C), jnp.float32),
        })
    return params


# ---------------------------- pure-JAX reference -----------------------------
def ref_forward(x, params, num_heads, alpha):
    C = x.shape[1]

    def ln(y, g, b):
        mu = y.mean(-1, keepdims=True)
        var = ((y - mu) ** 2).mean(-1, keepdims=True)
        return (y - mu) / jnp.sqrt(var + EPS) * g + b

    h = x @ params['fc_w'] + params['fc_b']
    h = jnp.maximum(ln(h, params['ln0_g'], params['ln0_b']), 0.0)
    for lp in params['layers']:
        N = h.shape[0]
        q = (h @ lp['wq'] + lp['bq']).reshape(N, num_heads, C)
        k = (h @ lp['wk'] + lp['bk']).reshape(N, num_heads, C)
        v = (h @ lp['wv'] + lp['bv']).reshape(N, num_heads, C)
        qn = q / jnp.linalg.norm(q)
        kn = k / jnp.linalg.norm(k)
        kvs = jnp.einsum('lhm,lhd->hmd', kn, v)
        num = jnp.einsum('nhm,hmd->nhd', qn, kvs) + N * v
        ks_sum = jnp.einsum('lhm->hm', kn)
        norm = jnp.einsum('nhm,hm->nh', qn, ks_sum)[..., None] + N
        attn_out = (num / norm).mean(axis=1)
        hr = alpha * attn_out + (1.0 - alpha) * h
        h = ln(hr, lp['ln_g'], lp['ln_b'])
    return h


if __name__ == "__main__":
    N, C = 16, 32          # nodes, in_channels (= hidden_channels here)
    num_heads = 2
    num_layers = 2
    alpha = 0.5

    key = jax.random.PRNGKey(0)
    kx, kp = jax.random.split(key)
    x = jax.random.normal(kx, (N, C), jnp.float32)
    params = init_params(kp, C, num_layers, num_heads)

    out = trans_conv_forward(x, params, num_heads=num_heads, alpha=alpha)
    out = jax.block_until_ready(out)

    ref = ref_forward(x, params, num_heads, alpha)
    np.testing.assert_allclose(np.asarray(out), np.asarray(ref), rtol=5e-2, atol=5e-2)
    print("KERNEL_OK")
</pallas_src>

<mosaic_0001>
module attributes {stable_mosaic.version = 11 : i64} {
  func.func @kernel(%arg0: memref<16x128xf32, #tpu.memory_space<vmem>>, %arg1: memref<128x128xf32, #tpu.memory_space<vmem>>, %arg2: memref<1x128xf32, #tpu.memory_space<vmem>>, %arg3: memref<1x128xf32, #tpu.memory_space<vmem>>, %arg4: memref<1x128xf32, #tpu.memory_space<vmem>>, %arg5: memref<2x128x768xf32, #tpu.memory_space<vmem>>, %arg6: memref<2x1x768xf32, #tpu.memory_space<vmem>>, %arg7: memref<2x1x128xf32, #tpu.memory_space<vmem>>, %arg8: memref<2x1x128xf32, #tpu.memory_space<vmem>>, %arg9: memref<256x256xf32, #tpu.memory_space<vmem>>, %arg10: memref<256x128xf32, #tpu.memory_space<vmem>>, %arg11: memref<16x128xf32, #tpu.memory_space<vmem>>) attributes {dimension_semantics = [], scalar_prefetch = 0 : i64, scratch_operands = 0 : i64, tpu.core_type = #tpu.core_type<tc>} {
    %c0 = arith.constant 0 : index
    %c0_0 = arith.constant 0 : index
    %0 = vector.load %arg0[%c0, %c0_0] : memref<16x128xf32, #tpu.memory_space<vmem>>, vector<16x128xf32>
    %c0_1 = arith.constant 0 : index
    %c0_2 = arith.constant 0 : index
    %1 = vector.load %arg9[%c0_1, %c0_2] : memref<256x256xf32, #tpu.memory_space<vmem>>, vector<256x256xf32>
    %c0_3 = arith.constant 0 : index
    %c0_4 = arith.constant 0 : index
    %2 = vector.load %arg10[%c0_3, %c0_4] : memref<256x128xf32, #tpu.memory_space<vmem>>, vector<256x128xf32>
    %c0_5 = arith.constant 0 : index
    %c0_6 = arith.constant 0 : index
    %3 = vector.load %arg1[%c0_5, %c0_6] : memref<128x128xf32, #tpu.memory_space<vmem>>, vector<128x128xf32>
    %cst = arith.constant dense<0.000000e+00> : vector<16x128xf32>
    %4 = tpu.matmul %0, %3, %cst {dimension_numbers = #tpu.dot_dimension_numbers<[1], [0], [0], [1], [0, 0, 1, 1], [], []>} : vector<16x128xf32>, vector<128x128xf32>, vector<16x128xf32> -> vector<16x128xf32>
    %c0_7 = arith.constant 0 : index
    %c0_8 = arith.constant 0 : index
    %5 = vector.load %arg2[%c0_7, %c0_8] : memref<1x128xf32, #tpu.memory_space<vmem>>, vector<1x128xf32>
    %6 = vector.broadcast %5 : vector<1x128xf32> to vector<16x128xf32>
    %7 = arith.addf %4, %6 : vector<16x128xf32>
    %c0_9 = arith.constant 0 : index
    %c0_10 = arith.constant 0 : index
    %8 = vector.load %arg3[%c0_9, %c0_10] : memref<1x128xf32, #tpu.memory_space<vmem>>, vector<1x128xf32>
    %c0_11 = arith.constant 0 : index
    %c0_12 = arith.constant 0 : index
    %9 = vector.load %arg4[%c0_11, %c0_12] : memref<1x128xf32, #tpu.memory_space<vmem>>, vector<1x128xf32>
    %cst_13 = arith.constant dense<0.000000e+00> : vector<16xf32>
    %10 = vector.multi_reduction <add>, %7, %cst_13 [1] : vector<16x128xf32> to vector<16xf32>
    %11 = vector.shape_cast %10 : vector<16xf32> to vector<16x1xf32>
    %cst_14 = arith.constant 3.125000e-02 : f32
    %12 = vector.broadcast %cst_14 : f32 to vector<16x1xf32>
    %13 = arith.mulf %11, %12 : vector<16x1xf32>
    %14 = arith.mulf %7, %7 : vector<16x128xf32>
    %cst_15 = arith.constant dense<0.000000e+00> : vector<16xf32>
    %15 = vector.multi_reduction <add>, %14, %cst_15 [1] : vector<16x128xf32> to vector<16xf32>
    %16 = vector.shape_cast %15 : vector<16xf32> to vector<16x1xf32>
    %cst_16 = arith.constant 3.125000e-02 : f32
    %17 = vector.broadcast %cst_16 : f32 to vector<16x1xf32>
    %18 = arith.mulf %16, %17 : vector<16x1xf32>
    %19 = arith.mulf %13, %13 : vector<16x1xf32>
    %20 = arith.subf %18, %19 : vector<16x1xf32>
    %21 = vector.broadcast %13 : vector<16x1xf32> to vector<16x128xf32>
    %22 = arith.subf %7, %21 : vector<16x128xf32>
    %cst_17 = arith.constant 9.99999974E-6 : f32
    %23 = vector.broadcast %cst_17 : f32 to vector<16x1xf32>
    %24 = arith.addf %20, %23 : vector<16x1xf32>
    %25 = math.rsqrt %24 : vector<16x1xf32>
    %26 = vector.broadcast %25 : vector<16x1xf32> to vector<16x128xf32>
    %27 = arith.mulf %22, %26 : vector<16x128xf32>
    %28 = vector.broadcast %8 : vector<1x128xf32> to vector<16x128xf32>
    %29 = arith.mulf %27, %28 : vector<16x128xf32>
    %30 = vector.broadcast %9 : vector<1x128xf32> to vector<16x128xf32>
    %31 = arith.addf %29, %30 : vector<16x128xf32>
    %cst_18 = arith.constant 0.000000e+00 : f32
    %32 = vector.broadcast %cst_18 : f32 to vector<16x128xf32>
    %33 = arith.maximumf %31, %32 : vector<16x128xf32>
    %c0_19 = arith.constant 0 : index
    %c0_20 = arith.constant 0 : index
    %c0_21 = arith.constant 0 : index
    %34 = vector.load %arg5[%c0_19, %c0_20, %c0_21] : memref<2x128x768xf32, #tpu.memory_space<vmem>>, vector<1x128x768xf32>
    %35 = vector.shape_cast %34 : vector<1x128x768xf32> to vector<128x768xf32>
    %cst_22 = arith.constant dense<0.000000e+00> : vector<16x768xf32>
    %36 = tpu.matmul %33, %35, %cst_22 {dimension_numbers = #tpu.dot_dimension_numbers<[1], [0], [0], [1], [0, 0, 1, 1], [], []>} : vector<16x128xf32>, vector<128x768xf32>, vector<16x768xf32> -> vector<16x768xf32>
    %c0_23 = arith.constant 0 : index
    %c0_24 = arith.constant 0 : index
    %c0_25 = arith.constant 0 : index
    %37 = vector.load %arg6[%c0_23, %c0_24, %c0_25] : memref<2x1x768xf32, #tpu.memory_space<vmem>>, vector<1x1x768xf32>
    %38 = vector.shape_cast %37 : vector<1x1x768xf32> to vector<1x768xf32>
    %39 = vector.broadcast %38 : vector<1x768xf32> to vector<16x768xf32>
    %40 = arith.addf %36, %39 : vector<16x768xf32>
    %41 = vector.extract_strided_slice %40 {offsets = [0, 0], sizes = [16, 256], strides = [1, 1]} : vector<16x768xf32> to vector<16x256xf32>
    %42 = vector.extract_strided_slice %40 {offsets = [0, 256], sizes = [16, 256], strides = [1, 1]} : vector<16x768xf32> to vector<16x256xf32>
    %43 = vector.extract_strided_slice %40 {offsets = [0, 512], sizes = [16, 256], strides = [1, 1]} : vector<16x768xf32> to vector<16x256xf32>
    %44 = arith.mulf %41, %41 : vector<16x256xf32>
    %45 = vector.shape_cast %44 : vector<16x256xf32> to vector<1x16x256xf32>
    %cst_26 = arith.constant dense<0.000000e+00> : vector<1xf32>
    %46 = vector.multi_reduction <add>, %45, %cst_26 [1, 2] : vector<1x16x256xf32> to vector<1xf32>
    %47 = vector.shape_cast %46 : vector<1xf32> to vector<1x1x1xf32>
    %48 = vector.extract %47[0, 0, 0] : f32 from vector<1x1x1xf32>
    %49 = math.rsqrt %48 : f32
    %50 = vector.broadcast %49 : f32 to vector<16x256xf32>
    %51 = arith.mulf %41, %50 : vector<16x256xf32>
    %52 = arith.mulf %42, %42 : vector<16x256xf32>
    %53 = vector.shape_cast %52 : vector<16x256xf32> to vector<1x16x256xf32>
    %cst_27 = arith.constant dense<0.000000e+00> : vector<1xf32>
    %54 = vector.multi_reduction <add>, %53, %cst_27 [1, 2] : vector<1x16x256xf32> to vector<1xf32>
    %55 = vector.shape_cast %54 : vector<1xf32> to vector<1x1x1xf32>
    %56 = vector.extract %55[0, 0, 0] : f32 from vector<1x1x1xf32>
    %57 = math.rsqrt %56 : f32
    %58 = vector.broadcast %57 : f32 to vector<16x256xf32>
    %59 = arith.mulf %42, %58 : vector<16x256xf32>
    %cst_28 = arith.constant dense<0.000000e+00> : vector<256x256xf32>
    %60 = tpu.matmul %59, %43, %cst_28 {dimension_numbers = #tpu.dot_dimension_numbers<[0], [0], [1], [1], [0, 1, 1, 1], [], []>} : vector<16x256xf32>, vector<16x256xf32>, vector<256x256xf32> -> vector<256x256xf32>
    %61 = arith.mulf %60, %1 : vector<256x256xf32>
    %cst_29 = arith.constant dense<0.000000e+00> : vector<16x256xf32>
    %62 = tpu.matmul %51, %61, %cst_29 {dimension_numbers = #tpu.dot_dimension_numbers<[1], [0], [0], [1], [0, 0, 1, 1], [], []>} : vector<16x256xf32>, vector<256x256xf32>, vector<16x256xf32> -> vector<16x256xf32>
    %cst_30 = arith.constant 1.600000e+01 : f32
    %63 = vector.broadcast %cst_30 : f32 to vector<16x256xf32>
    %64 = arith.mulf %63, %43 : vector<16x256xf32>
    %65 = arith.addf %62, %64 : vector<16x256xf32>
    %cst_31 = arith.constant dense<0.000000e+00> : vector<256xf32>
    %66 = vector.multi_reduction <add>, %59, %cst_31 [0] : vector<16x256xf32> to vector<256xf32>
    %67 = vector.shape_cast %66 : vector<256xf32> to vector<1x256xf32>
    %68 = vector.broadcast %67 : vector<1x256xf32> to vector<16x256xf32>
    %69 = arith.mulf %51, %68 : vector<16x256xf32>
    %cst_32 = arith.constant dense<0.000000e+00> : vector<16x256xf32>
    %70 = tpu.matmul %69, %1, %cst_32 {dimension_numbers = #tpu.dot_dimension_numbers<[1], [0], [0], [1], [0, 0, 1, 1], [], []>} : vector<16x256xf32>, vector<256x256xf32>, vector<16x256xf32> -> vector<16x256xf32>
    %cst_33 = arith.constant 1.600000e+01 : f32
    %71 = vector.broadcast %cst_33 : f32 to vector<16x256xf32>
    %72 = arith.addf %70, %71 : vector<16x256xf32>
    %73 = tpu.reciprocal %72 {approx = true} : vector<16x256xf32> -> vector<16x256xf32>
    %74 = arith.mulf %65, %73 : vector<16x256xf32>
    %cst_34 = arith.constant dense<0.000000e+00> : vector<16x128xf32>
    %75 = tpu.matmul %74, %2, %cst_34 {dimension_numbers = #tpu.dot_dimension_numbers<[1], [0], [0], [1], [0, 0, 1, 1], [], []>} : vector<16x256xf32>, vector<256x128xf32>, vector<16x128xf32> -> vector<16x128xf32>
    %cst_35 = arith.constant 5.000000e-01 : f32
    %76 = vector.broadcast %cst_35 : f32 to vector<16x128xf32>
    %77 = arith.mulf %76, %33 : vector<16x128xf32>
    %78 = arith.addf %75, %77 : vector<16x128xf32>
    %c0_36 = arith.constant 0 : index
    %c0_37 = arith.constant 0 : index
    %c0_38 = arith.constant 0 : index
    %79 = vector.load %arg7[%c0_36, %c0_37, %c0_38] : memref<2x1x128xf32, #tpu.memory_space<vmem>>, vector<1x1x128xf32>
    %80 = vector.shape_cast %79 : vector<1x1x128xf32> to vector<1x128xf32>
    %c0_39 = arith.constant 0 : index
    %c0_40 = arith.constant 0 : index
    %c0_41 = arith.constant 0 : index
    %81 = vector.load %arg8[%c0_39, %c0_40, %c0_41] : memref<2x1x128xf32, #tpu.memory_space<vmem>>, vector<1x1x128xf32>
    %82 = vector.shape_cast %81 : vector<1x1x128xf32> to vector<1x128xf32>
    %cst_42 = arith.constant dense<0.000000e+00> : vector<16xf32>
    %83 = vector.multi_reduction <add>, %78, %cst_42 [1] : vector<16x128xf32> to vector<16xf32>
    %84 = vector.shape_cast %83 : vector<16xf32> to vector<16x1xf32>
    %cst_43 = arith.constant 3.125000e-02 : f32
    %85 = vector.broadcast %cst_43 : f32 to vector<16x1xf32>
    %86 = arith.mulf %84, %85 : vector<16x1xf32>
    %87 = arith.mulf %78, %78 : vector<16x128xf32>
    %cst_44 = arith.constant dense<0.000000e+00> : vector<16xf32>
    %88 = vector.multi_reduction <add>, %87, %cst_44 [1] : vector<16x128xf32> to vector<16xf32>
    %89 = vector.shape_cast %88 : vector<16xf32> to vector<16x1xf32>
    %cst_45 = arith.constant 3.125000e-02 : f32
    %90 = vector.broadcast %cst_45 : f32 to vector<16x1xf32>
    %91 = arith.mulf %89, %90 : vector<16x1xf32>
    %92 = arith.mulf %86, %86 : vector<16x1xf32>
    %93 = arith.subf %91, %92 : vector<16x1xf32>
    %94 = vector.broadcast %86 : vector<16x1xf32> to vector<16x128xf32>
    %95 = arith.subf %78, %94 : vector<16x128xf32>
    %cst_46 = arith.constant 9.99999974E-6 : f32
    %96 = vector.broadcast %cst_46 : f32 to vector<16x1xf32>
    %97 = arith.addf %93, %96 : vector<16x1xf32>
    %98 = math.rsqrt %97 : vector<16x1xf32>
    %99 = vector.broadcast %98 : vector<16x1xf32> to vector<16x128xf32>
    %100 = arith.mulf %95, %99 : vector<16x128xf32>
    %101 = vector.broadcast %80 : vector<1x128xf32> to vector<16x128xf32>
    %102 = arith.mulf %100, %101 : vector<16x128xf32>
    %103 = vector.broadcast %82 : vector<1x128xf32> to vector<16x128xf32>
    %104 = arith.addf %102, %103 : vector<16x128xf32>
    %c1 = arith.constant 1 : index
    %c0_47 = arith.constant 0 : index
    %c0_48 = arith.constant 0 : index
    %105 = vector.load %arg5[%c1, %c0_47, %c0_48] : memref<2x128x768xf32, #tpu.memory_space<vmem>>, vector<1x128x768xf32>
    %106 = vector.shape_cast %105 : vector<1x128x768xf32> to vector<128x768xf32>
    %cst_49 = arith.constant dense<0.000000e+00> : vector<16x768xf32>
    %107 = tpu.matmul %104, %106, %cst_49 {dimension_numbers = #tpu.dot_dimension_numbers<[1], [0], [0], [1], [0, 0, 1, 1], [], []>} : vector<16x128xf32>, vector<128x768xf32>, vector<16x768xf32> -> vector<16x768xf32>
    %c1_50 = arith.constant 1 : index
    %c0_51 = arith.constant 0 : index
    %c0_52 = arith.constant 0 : index
    %108 = vector.load %arg6[%c1_50, %c0_51, %c0_52] : memref<2x1x768xf32, #tpu.memory_space<vmem>>, vector<1x1x768xf32>
    %109 = vector.shape_cast %108 : vector<1x1x768xf32> to vector<1x768xf32>
    %110 = vector.broadcast %109 : vector<1x768xf32> to vector<16x768xf32>
    %111 = arith.addf %107, %110 : vector<16x768xf32>
    %112 = vector.extract_strided_slice %111 {offsets = [0, 0], sizes = [16, 256], strides = [1, 1]} : vector<16x768xf32> to vector<16x256xf32>
    %113 = vector.extract_strided_slice %111 {offsets = [0, 256], sizes = [16, 256], strides = [1, 1]} : vector<16x768xf32> to vector<16x256xf32>
    %114 = vector.extract_strided_slice %111 {offsets = [0, 512], sizes = [16, 256], strides = [1, 1]} : vector<16x768xf32> to vector<16x256xf32>
    %115 = arith.mulf %112, %112 : vector<16x256xf32>
    %116 = vector.shape_cast %115 : vector<16x256xf32> to vector<1x16x256xf32>
    %cst_53 = arith.constant dense<0.000000e+00> : vector<1xf32>
    %117 = vector.multi_reduction <add>, %116, %cst_53 [1, 2] : vector<1x16x256xf32> to vector<1xf32>
    %118 = vector.shape_cast %117 : vector<1xf32> to vector<1x1x1xf32>
    %119 = vector.extract %118[0, 0, 0] : f32 from vector<1x1x1xf32>
    %120 = math.rsqrt %119 : f32
    %121 = vector.broadcast %120 : f32 to vector<16x256xf32>
    %122 = arith.mulf %112, %121 : vector<16x256xf32>
    %123 = arith.mulf %113, %113 : vector<16x256xf32>
    %124 = vector.shape_cast %123 : vector<16x256xf32> to vector<1x16x256xf32>
    %cst_54 = arith.constant dense<0.000000e+00> : vector<1xf32>
    %125 = vector.multi_reduction <add>, %124, %cst_54 [1, 2] : vector<1x16x256xf32> to vector<1xf32>
    %126 = vector.shape_cast %125 : vector<1xf32> to vector<1x1x1xf32>
    %127 = vector.extract %126[0, 0, 0] : f32 from vector<1x1x1xf32>
    %128 = math.rsqrt %127 : f32
    %129 = vector.broadcast %128 : f32 to vector<16x256xf32>
    %130 = arith.mulf %113, %129 : vector<16x256xf32>
    %cst_55 = arith.constant dense<0.000000e+00> : vector<256x256xf32>
    %131 = tpu.matmul %130, %114, %cst_55 {dimension_numbers = #tpu.dot_dimension_numbers<[0], [0], [1], [1], [0, 1, 1, 1], [], []>} : vector<16x256xf32>, vector<16x256xf32>, vector<256x256xf32> -> vector<256x256xf32>
    %132 = arith.mulf %131, %1 : vector<256x256xf32>
    %cst_56 = arith.constant dense<0.000000e+00> : vector<16x256xf32>
    %133 = tpu.matmul %122, %132, %cst_56 {dimension_numbers = #tpu.dot_dimension_numbers<[1], [0], [0], [1], [0, 0, 1, 1], [], []>} : vector<16x256xf32>, vector<256x256xf32>, vector<16x256xf32> -> vector<16x256xf32>
    %cst_57 = arith.constant 1.600000e+01 : f32
    %134 = vector.broadcast %cst_57 : f32 to vector<16x256xf32>
    %135 = arith.mulf %134, %114 : vector<16x256xf32>
    %136 = arith.addf %133, %135 : vector<16x256xf32>
    %cst_58 = arith.constant dense<0.000000e+00> : vector<256xf32>
    %137 = vector.multi_reduction <add>, %130, %cst_58 [0] : vector<16x256xf32> to vector<256xf32>
    %138 = vector.shape_cast %137 : vector<256xf32> to vector<1x256xf32>
    %139 = vector.broadcast %138 : vector<1x256xf32> to vector<16x256xf32>
    %140 = arith.mulf %122, %139 : vector<16x256xf32>
    %cst_59 = arith.constant dense<0.000000e+00> : vector<16x256xf32>
    %141 = tpu.matmul %140, %1, %cst_59 {dimension_numbers = #tpu.dot_dimension_numbers<[1], [0], [0], [1], [0, 0, 1, 1], [], []>} : vector<16x256xf32>, vector<256x256xf32>, vector<16x256xf32> -> vector<16x256xf32>
    %cst_60 = arith.constant 1.600000e+01 : f32
    %142 = vector.broadcast %cst_60 : f32 to vector<16x256xf32>
    %143 = arith.addf %141, %142 : vector<16x256xf32>
    %144 = tpu.reciprocal %143 {approx = true} : vector<16x256xf32> -> vector<16x256xf32>
    %145 = arith.mulf %136, %144 : vector<16x256xf32>
    %cst_61 = arith.constant dense<0.000000e+00> : vector<16x128xf32>
    %146 = tpu.matmul %145, %2, %cst_61 {dimension_numbers = #tpu.dot_dimension_numbers<[1], [0], [0], [1], [0, 0, 1, 1], [], []>} : vector<16x256xf32>, vector<256x128xf32>, vector<16x128xf32> -> vector<16x128xf32>
    %cst_62 = arith.constant 5.000000e-01 : f32
    %147 = vector.broadcast %cst_62 : f32 to vector<16x128xf32>
    %148 = arith.mulf %147, %104 : vector<16x128xf32>
    %149 = arith.addf %146, %148 : vector<16x128xf32>
    %c1_63 = arith.constant 1 : index
    %c0_64 = arith.constant 0 : index
    %c0_65 = arith.constant 0 : index
    %150 = vector.load %arg7[%c1_63, %c0_64, %c0_65] : memref<2x1x128xf32, #tpu.memory_space<vmem>>, vector<1x1x128xf32>
    %151 = vector.shape_cast %150 : vector<1x1x128xf32> to vector<1x128xf32>
    %c1_66 = arith.constant 1 : index
    %c0_67 = arith.constant 0 : index
    %c0_68 = arith.constant 0 : index
    %152 = vector.load %arg8[%c1_66, %c0_67, %c0_68] : memref<2x1x128xf32, #tpu.memory_space<vmem>>, vector<1x1x128xf32>
    %153 = vector.shape_cast %152 : vector<1x1x128xf32> to vector<1x128xf32>
    %cst_69 = arith.constant dense<0.000000e+00> : vector<16xf32>
    %154 = vector.multi_reduction <add>, %149, %cst_69 [1] : vector<16x128xf32> to vector<16xf32>
    %155 = vector.shape_cast %154 : vector<16xf32> to vector<16x1xf32>
    %cst_70 = arith.constant 3.125000e-02 : f32
    %156 = vector.broadcast %cst_70 : f32 to vector<16x1xf32>
    %157 = arith.mulf %155, %156 : vector<16x1xf32>
    %158 = arith.mulf %149, %149 : vector<16x128xf32>
    %cst_71 = arith.constant dense<0.000000e+00> : vector<16xf32>
    %159 = vector.multi_reduction <add>, %158, %cst_71 [1] : vector<16x128xf32> to vector<16xf32>
    %160 = vector.shape_cast %159 : vector<16xf32> to vector<16x1xf32>
    %cst_72 = arith.constant 3.125000e-02 : f32
    %161 = vector.broadcast %cst_72 : f32 to vector<16x1xf32>
    %162 = arith.mulf %160, %161 : vector<16x1xf32>
    %163 = arith.mulf %157, %157 : vector<16x1xf32>
    %164 = arith.subf %162, %163 : vector<16x1xf32>
    %165 = vector.broadcast %157 : vector<16x1xf32> to vector<16x128xf32>
    %166 = arith.subf %149, %165 : vector<16x128xf32>
    %cst_73 = arith.constant 9.99999974E-6 : f32
    %167 = vector.broadcast %cst_73 : f32 to vector<16x1xf32>
    %168 = arith.addf %164, %167 : vector<16x1xf32>
    %169 = math.rsqrt %168 : vector<16x1xf32>
    %170 = vector.broadcast %169 : vector<16x1xf32> to vector<16x128xf32>
    %171 = arith.mulf %166, %170 : vector<16x128xf32>
    %172 = vector.broadcast %151 : vector<1x128xf32> to vector<16x128xf32>
    %173 = arith.mulf %171, %172 : vector<16x128xf32>
    %174 = vector.broadcast %153 : vector<1x128xf32> to vector<16x128xf32>
    %175 = arith.addf %173, %174 : vector<16x128xf32>
    %c0_74 = arith.constant 0 : index
    %c0_75 = arith.constant 0 : index
    %176 = vector.load %arg11[%c0_74, %c0_75] : memref<16x128xf32, #tpu.memory_space<vmem>>, vector<16x128xf32>
    tpu.vector_store %arg11[%c0_74, %c0_75], %175 {strides = array<i32>} : memref<16x128xf32, #tpu.memory_space<vmem>>, vector<16x128xf32>,
    return
  }
}

</mosaic_0001>

<llo_original>
// kernel: tpu_custom_call.1
$region0: #{tpu_custom_call.1}
  #allocation0 [shape = 'u32[]', space=smem, size = 0x4, offset = 0x4, fixed_abs, tag = 'smem constant byte address 0x4 - core index']
  #allocation1 [shape = 'u32[144,128]{1,0:T(1,128)}', space=vmem, size = 0x12000, scoped, tag = 'internal scratch']
  %s0 = inlined_call_operand.hbm [shape: f32[16,128], index: 0, kind: input, shape index: {}]
  %s1 = inlined_call_operand.hbm [shape: f32[128,128], index: 1, kind: input, shape index: {}]
  %s2 = inlined_call_operand.vmem [shape: f32[1,128], index: 2, kind: input, shape index: {}]
  %s3 = inlined_call_operand.vmem [shape: f32[1,128], index: 3, kind: input, shape index: {}]
  %s4 = inlined_call_operand.vmem [shape: f32[1,128], index: 4, kind: input, shape index: {}]
  %s5 = inlined_call_operand.hbm [shape: f32[2,128,768], index: 5, kind: input, shape index: {}]
  %s6 = inlined_call_operand.vmem [shape: f32[2,1,768], index: 6, kind: input, shape index: {}]
  %s7 = inlined_call_operand.vmem [shape: f32[2,1,128], index: 7, kind: input, shape index: {}]
  %s8 = inlined_call_operand.vmem [shape: f32[2,1,128], index: 8, kind: input, shape index: {}]
  %s9 = inlined_call_operand.hbm [shape: f32[256,256], index: 9, kind: input, shape index: {}]
  %s10 = inlined_call_operand.hbm [shape: f32[256,128], index: 10, kind: input, shape index: {}]
  %s11 = inlined_call_operand.hbm [shape: f32[16,128], index: 11, kind: output, shape index: {}]
  %s12 = sld [smem:[#allocation0]]
  $region74: #{tpu_custom_call.1} parent=0
    _
  %s14 = ssub.s32 1, %s12
  %s15 = scalar_select 0, %s14, %s12
  $region1: #{tpu_custom_call.1} parent=0
    #allocation2 [shape = 'u8[8192]{0}', space=vmem, size = 0x2000, scoped, tag = 'input window, operand 0, single buffered']
    #allocation3 [shape = 's32[1]{0}', space=sflag, size = 0x4, scoped, tag = 'scoped memory for tpu_custom_call.1']
    #allocation4 [shape = 's32[1]{0}', space=sflag, size = 0x4, scoped, tag = 'scoped memory for tpu_custom_call.1']
    #allocation5 [shape = 'u8[65536]{0}', space=vmem, size = 0x10000, scoped, tag = 'input window, operand 1, single buffered']
    #allocation6 [shape = 's32[1]{0}', space=sflag, size = 0x4, scoped, tag = 'scoped memory for tpu_custom_call.1']
    #allocation7 [shape = 'u8[786432]{0}', space=vmem, size = 0xc0000, scoped, tag = 'input window, operand 5, single buffered']
    #allocation8 [shape = 'u8[262144]{0}', space=vmem, size = 0x40000, scoped, tag = 'input window, operand 9, single buffered']
    #allocation9 [shape = 's32[1]{0}', space=sflag, size = 0x4, scoped, tag = 'scoped memory for tpu_custom_call.1']
    #allocation10 [shape = 'u8[131072]{0}', space=vmem, size = 0x20000, scoped, tag = 'input window, operand 10, single buffered']
    #allocation11 [shape = 'u8[8192]{0}', space=vmem, size = 0x2000, scoped, tag = 'output window, operand 0, single buffered']
    %16 = vsyncpa [#allocation3], 0
    %17 = vsyncpa [#allocation6], 0
    %18 = vsyncpa [#allocation9], 0
    %19 = vsyncpa [#allocation4], 0
    // Predicated region
    $region2: #{tpu_custom_call.1} parent=1 // pred_check
      _
    $region3: #{tpu_custom_call.1} parent=1 // pred_check_branch
      %21 = sbr.rel (0) target = $region5
    $region4: #{tpu_custom_call.1} parent=1 // pred_region
      %s23 = ssub.s32 256, 256
      %24 = vsyncadd [#allocation3], %s23
      %s25 = sshll.u32 [#allocation2], 4
      %s26 = int_to_ptr.vmem [resolvable:$true] %s25
      %31 = dma.hbm_to_vmem [thread:$0]  %s0, 256, %s26, [#allocation3], 128, 128, 8
    $region5: #{tpu_custom_call.1} parent=1 // pred_fallthru
      _
    // Predicated region
    $region6: #{tpu_custom_call.1} parent=1 // pred_check
      _
    $region7: #{tpu_custom_call.1} parent=1 // pred_check_branch
      %33 = sbr.rel (0) target = $region9
    $region8: #{tpu_custom_call.1} parent=1 // pred_region
      %s35 = ssub.s32 2048, 2048
      %36 = vsyncadd [#allocation6], %s35
      %s37 = sshll.u32 [#allocation5], 4
      %s38 = int_to_ptr.vmem [resolvable:$true] %s37
      %43 = dma.hbm_to_vmem [thread:$0]  %s1, 2048, %s38, [#allocation6], 128, 128, 8
    $region9: #{tpu_custom_call.1} parent=1 // pred_fallthru
      _
    // Predicated region
    $region10: #{tpu_custom_call.1} parent=1 // pred_check
      _
    $region11: #{tpu_custom_call.1} parent=1 // pred_check_branch
      %45 = sbr.rel (0) target = $region13
    $region12: #{tpu_custom_call.1} parent=1 // pred_region
      _
    $region13: #{tpu_custom_call.1} parent=1 // pred_fallthru
      _
    // Predicated region
    $region14: #{tpu_custom_call.1} parent=1 // pred_check
      _
    $region15: #{tpu_custom_call.1} parent=1 // pred_check_branch
      %47 = sbr.rel (0) target = $region17
    $region16: #{tpu_custom_call.1} parent=1 // pred_region
      _
    $region17: #{tpu_custom_call.1} parent=1 // pred_fallthru
      _
    // Predicated region
    $region18: #{tpu_custom_call.1} parent=1 // pred_check
      _
    $region19: #{tpu_custom_call.1} parent=1 // pred_check_branch
      %49 = sbr.rel (0) target = $region21
    $region20: #{tpu_custom_call.1} parent=1 // pred_region
      _
    $region21: #{tpu_custom_call.1} parent=1 // pred_fallthru
      _
    // Predicated region
    $region22: #{tpu_custom_call.1} parent=1 // pred_check
      _
    $region23: #{tpu_custom_call.1} parent=1 // pred_check_branch
      %51 = sbr.rel (0) target = $region25
    $region24: #{tpu_custom_call.1} parent=1 // pred_region
      %s53 = ssub.s32 24576, 24576
      %54 = vsyncadd [#allocation6], %s53
      %s55 = sshll.u32 [#allocation7], 4
      %s56 = int_to_ptr.vmem [resolvable:$true] %s55
      %61 = dma.hbm_to_vmem [thread:$0]  %s5, 24576, %s56, [#allocation6], 768, 768, 48
    $region25: #{tpu_custom_call.1} parent=1 // pred_fallthru
      _
    // Predicated region
    $region26: #{tpu_custom_call.1} parent=1 // pred_check
      _
    $region27: #{tpu_custom_call.1} parent=1 // pred_check_branch
      %63 = sbr.rel (0) target = $region29
    $region28: #{tpu_custom_call.1} parent=1 // pred_region
      _
    $region29: #{tpu_custom_call.1} parent=1 // pred_fallthru
      _
    // Predicated region
    $region30: #{tpu_custom_call.1} parent=1 // pred_check
      _
    $region31: #{tpu_custom_call.1} parent=1 // pred_check_branch
      %65 = sbr.rel (0) target = $region33
    $region32: #{tpu_custom_call.1} parent=1 // pred_region
      _
    $region33: #{tpu_custom_call.1} parent=1 // pred_fallthru
      _
    // Predicated region
    $region34: #{tpu_custom_call.1} parent=1 // pred_check
      _
    $region35: #{tpu_custom_call.1} parent=1 // pred_check_branch
      %67 = sbr.rel (0) target = $region37
    $region36: #{tpu_custom_call.1} parent=1 // pred_region
      _
    $region37: #{tpu_custom_call.1} parent=1 // pred_fallthru
      _
    // Predicated region
    $region38: #{tpu_custom_call.1} parent=1 // pred_check
      _
    $region39: #{tpu_custom_call.1} parent=1 // pred_check_branch
      %69 = sbr.rel (0) target = $region41
    $region40: #{tpu_custom_call.1} parent=1 // pred_region
      %s71 = ssub.s32 8192, 8192
      %72 = vsyncadd [#allocation9], %s71
      %s73 = sshll.u32 [#allocation8], 4
      %s74 = int_to_ptr.vmem [resolvable:$true] %s73
      %79 = dma.hbm_to_vmem [thread:$0]  %s9, 8192, %s74, [#allocation9], 256, 256, 16
    $region41: #{tpu_custom_call.1} parent=1 // pred_fallthru
      _
    // Predicated region
    $region42: #{tpu_custom_call.1} parent=1 // pred_check
      _
    $region43: #{tpu_custom_call.1} parent=1 // pred_check_branch
      %81 = sbr.rel (0) target = $region45
    $region44: #{tpu_custom_call.1} parent=1 // pred_region
      %s83 = ssub.s32 4096, 4096
      %84 = vsyncadd [#allocation9], %s83
      %s85 = sshll.u32 [#allocation10], 4
      %s86 = int_to_ptr.vmem [resolvable:$true] %s85
      %91 = dma.hbm_to_vmem [thread:$0]  %s10, 4096, %s86, [#allocation9], 128, 128, 8
    $region45: #{tpu_custom_call.1} parent=1 // pred_fallthru
      _
    // Predicated region
    $region46: #{tpu_custom_call.1} parent=1 // pred_check
      _
    $region47: #{tpu_custom_call.1} parent=1 // pred_check_branch
      %93 = sbr.rel (0) target = $region49
    $region48: #{tpu_custom_call.1} parent=1 // pred_region
      %94 = dma.done [#allocation3], 256
    $region49: #{tpu_custom_call.1} parent=1 // pred_fallthru
      _
    // Predicated region
    $region50: #{tpu_custom_call.1} parent=1 // pred_check
      _
    $region51: #{tpu_custom_call.1} parent=1 // pred_check_branch
      %96 = sbr.rel (0) target = $region53
    $region52: #{tpu_custom_call.1} parent=1 // pred_region
      %97 = dma.done [#allocation6], 2048
    $region53: #{tpu_custom_call.1} parent=1 // pred_fallthru
      _
    // Predicated region
    $region54: #{tpu_custom_call.1} parent=1 // pred_check
      _
    $region55: #{tpu_custom_call.1} parent=1 // pred_check_branch
      %99 = sbr.rel (0) target = $region57
    $region56: #{tpu_custom_call.1} parent=1 // pred_region
      %100 = dma.done [#allocation6], 24576
    $region57: #{tpu_custom_call.1} parent=1 // pred_fallthru
      _
    // Predicated region
    $region58: #{tpu_custom_call.1} parent=1 // pred_check
      _
    $region59: #{tpu_custom_call.1} parent=1 // pred_check_branch
      %102 = sbr.rel (0) target = $region61
    $region60: #{tpu_custom_call.1} parent=1 // pred_region
      %103 = dma.done [#allocation9], 8192
    $region61: #{tpu_custom_call.1} parent=1 // pred_fallthru
      _
    // Predicated region
    $region62: #{tpu_custom_call.1} parent=1 // pred_check
      _
    $region63: #{tpu_custom_call.1} parent=1 // pred_check_branch
      %105 = sbr.rel (0) target = $region65
    $region64: #{tpu_custom_call.1} parent=1 // pred_region
      %106 = dma.done [#allocation9], 4096
    $region65: #{tpu_custom_call.1} parent=1 // pred_fallthru
      _
    %v107 = vld [vmem:[#allocation2] sm:$0xff]
    %v108 = vld [vmem:[#allocation2 + $0x8] sm:$0xff]
    %v109 = vld [vmem:[#allocation8] sm:$0xff]
    %v110 = vld [vmem:[#allocation8 + $0x8] sm:$0xff]
    %v111 = vld [vmem:[#allocation8 + $0x10] sm:$0xff]
    %v112 = vld [vmem:[#allocation8 + $0x18] sm:$0xff]
    %v113 = vld [vmem:[#allocation8 + $0x20] sm:$0xff]
    %v114 = vld [vmem:[#allocation8 + $0x28] sm:$0xff]
    %v115 = vld [vmem:[#allocation8 + $0x30] sm:$0xff]
    %v116 = vld [vmem:[#allocation8 + $0x38] sm:$0xff]
    %v117 = vld [vmem:[#allocation8 + $0x40] sm:$0xff]
    %v118 = vld [vmem:[#allocation8 + $0x48] sm:$0xff]
    %v119 = vld [vmem:[#allocation8 + $0x50] sm:$0xff]
    %v120 = vld [vmem:[#allocation8 + $0x58] sm:$0xff]
    %v121 = vld [vmem:[#allocation8 + $0x60] sm:$0xff]
    %v122 = vld [vmem:[#allocation8 + $0x68] sm:$0xff]
    %v123 = vld [vmem:[#allocation8 + $0x70] sm:$0xff]
    %v124 = vld [vmem:[#allocation8 + $0x78] sm:$0xff]
    %v125 = vld [vmem:[#allocation8 + $0x80] sm:$0xff]
    %v126 = vld [vmem:[#allocation8 + $0x88] sm:$0xff]
    %v127 = vld [vmem:[#allocation8 + $0x90] sm:$0xff]
    %v128 = vld [vmem:[#allocation8 + $0x98] sm:$0xff]
    %v129 = vld [vmem:[#allocation8 + $0xa0] sm:$0xff]
    %v130 = vld [vmem:[#allocation8 + $0xa8] sm:$0xff]
    %v131 = vld [vmem:[#allocation8 + $0xb0] sm:$0xff]
    %v132 = vld [vmem:[#allocation8 + $0xb8] sm:$0xff]
    %v133 = vld [vmem:[#allocation8 + $0xc0] sm:$0xff]
    %v134 = vld [vmem:[#allocation8 + $0xc8] sm:$0xff]
    %v135 = vld [vmem:[#allocation8 + $0xd0] sm:$0xff]
    %v136 = vld [vmem:[#allocation8 + $0xd8] sm:$0xff]
    %v137 = vld [vmem:[#allocation8 + $0xe0] sm:$0xff]
    %v138 = vld [vmem:[#allocation8 + $0xe8] sm:$0xff]
    %v139 = vld [vmem:[#allocation8 + $0xf0] sm:$0xff]
    %v140 = vld [vmem:[#allocation8 + $0xf8] sm:$0xff]
    %v141 = vld [vmem:[#allocation8 + $0x100] sm:$0xff]
    %v142 = vld [vmem:[#allocation8 + $0x108] sm:$0xff]
    %v143 = vld [vmem:[#allocation8 + $0x110] sm:$0xff]
    %v144 = vld [vmem:[#allocation8 + $0x118] sm:$0xff]
    %v145 = vld [vmem:[#allocation8 + $0x120] sm:$0xff]
    %v146 = vld [vmem:[#allocation8 + $0x128] sm:$0xff]
    %v147 = vld [vmem:[#allocation8 + $0x130] sm:$0xff]
    %v148 = vld [vmem:[#allocation8 + $0x138] sm:$0xff]
    %v149 = vld [vmem:[#allocation8 + $0x140] sm:$0xff]
    %v150 = vld [vmem:[#allocation8 + $0x148] sm:$0xff]
    %v151 = vld [vmem:[#allocation8 + $0x150] sm:$0xff]
    %v152 = vld [vmem:[#allocation8 + $0x158] sm:$0xff]
    %v153 = vld [vmem:[#allocation8 + $0x160] sm:$0xff]
    %v154 = vld [vmem:[#allocation8 + $0x168] sm:$0xff]
    %v155 = vld [vmem:[#allocation8 + $0x170] sm:$0xff]
    %v156 = vld [vmem:[#allocation8 + $0x178] sm:$0xff]
    %v157 = vld [vmem:[#allocation8 + $0x180] sm:$0xff]
    %v158 = vld [vmem:[#allocation8 + $0x188] sm:$0xff]
    %v159 = vld [vmem:[#allocation8 + $0x190] sm:$0xff]
    %v160 = vld [vmem:[#allocation8 + $0x198] sm:$0xff]
    %v161 = vld [vmem:[#allocation8 + $0x1a0] sm:$0xff]
    %v162 = vld [vmem:[#allocation8 + $0x1a8] sm:$0xff]
    %v163 = vld [vmem:[#allocation8 + $0x1b0] sm:$0xff]
    %v164 = vld [vmem:[#allocation8 + $0x1b8] sm:$0xff]
    %v165 = vld [vmem:[#allocation8 + $0x1c0] sm:$0xff]
    %v166 = vld [vmem:[#allocation8 + $0x1c8] sm:$0xff]
    %v167 = vld [vmem:[#allocation8 + $0x1d0] sm:$0xff]
    %v168 = vld [vmem:[#allocation8 + $0x1d8] sm:$0xff]
    %v169 = vld [vmem:[#allocation8 + $0x1e0] sm:$0xff]
    %v170 = vld [vmem:[#allocation8 + $0x1e8] sm:$0xff]
    %v171 = vld [vmem:[#allocation8 + $0x1f0] sm:$0xff]
    %v172 = vld [vmem:[#allocation8 + $0x1f8] sm:$0xff]
    %v173 = vld [vmem:[#allocation10] sm:$0xff]
    %v174 = vld [vmem:[#allocation10 + $0x8] sm:$0xff]
    %v175 = vld [vmem:[#allocation10 + $0x10] sm:$0xff]
    %v176 = vld [vmem:[#allocation10 + $0x18] sm:$0xff]
    %v177 = vld [vmem:[#allocation10 + $0x20] sm:$0xff]
    %v178 = vld [vmem:[#allocation10 + $0x28] sm:$0xff]
    %v179 = vld [vmem:[#allocation10 + $0x30] sm:$0xff]
    %v180 = vld [vmem:[#allocation10 + $0x38] sm:$0xff]
    %v181 = vld [vmem:[#allocation10 + $0x40] sm:$0xff]
    %v182 = vld [vmem:[#allocation10 + $0x48] sm:$0xff]
    %v183 = vld [vmem:[#allocation10 + $0x50] sm:$0xff]
    %v184 = vld [vmem:[#allocation10 + $0x58] sm:$0xff]
    %v185 = vld [vmem:[#allocation10 + $0x60] sm:$0xff]
    %v186 = vld [vmem:[#allocation10 + $0x68] sm:$0xff]
    %v187 = vld [vmem:[#allocation10 + $0x70] sm:$0xff]
    %v188 = vld [vmem:[#allocation10 + $0x78] sm:$0xff]
    %v189 = vld [vmem:[#allocation10 + $0x80] sm:$0xff]
    %v190 = vld [vmem:[#allocation10 + $0x88] sm:$0xff]
    %v191 = vld [vmem:[#allocation10 + $0x90] sm:$0xff]
    %v192 = vld [vmem:[#allocation10 + $0x98] sm:$0xff]
    %v193 = vld [vmem:[#allocation10 + $0xa0] sm:$0xff]
    %v194 = vld [vmem:[#allocation10 + $0xa8] sm:$0xff]
    %v195 = vld [vmem:[#allocation10 + $0xb0] sm:$0xff]
    %v196 = vld [vmem:[#allocation10 + $0xb8] sm:$0xff]
    %v197 = vld [vmem:[#allocation10 + $0xc0] sm:$0xff]
    %v198 = vld [vmem:[#allocation10 + $0xc8] sm:$0xff]
    %v199 = vld [vmem:[#allocation10 + $0xd0] sm:$0xff]
    %v200 = vld [vmem:[#allocation10 + $0xd8] sm:$0xff]
    %v201 = vld [vmem:[#allocation10 + $0xe0] sm:$0xff]
    %v202 = vld [vmem:[#allocation10 + $0xe8] sm:$0xff]
    %v203 = vld [vmem:[#allocation10 + $0xf0] sm:$0xff]
    %v204 = vld [vmem:[#allocation10 + $0xf8] sm:$0xff]
    %v205 = vld [vmem:[#allocation5] sm:$0xff]
    %v206 = vld [vmem:[#allocation5 + $0x8] sm:$0xff]
    %v207 = vld [vmem:[#allocation5 + $0x10] sm:$0xff]
    %v208 = vld [vmem:[#allocation5 + $0x18] sm:$0xff]
    %v209 = vld [vmem:[#allocation5 + $0x20] sm:$0xff]
    %v210 = vld [vmem:[#allocation5 + $0x28] sm:$0xff]
    %v211 = vld [vmem:[#allocation5 + $0x30] sm:$0xff]
    %v212 = vld [vmem:[#allocation5 + $0x38] sm:$0xff]
    %v213 = vld [vmem:[#allocation5 + $0x40] sm:$0xff]
    %v214 = vld [vmem:[#allocation5 + $0x48] sm:$0xff]
    %v215 = vld [vmem:[#allocation5 + $0x50] sm:$0xff]
    %v216 = vld [vmem:[#allocation5 + $0x58] sm:$0xff]
    %v217 = vld [vmem:[#allocation5 + $0x60] sm:$0xff]
    %v218 = vld [vmem:[#allocation5 + $0x68] sm:$0xff]
    %v219 = vld [vmem:[#allocation5 + $0x70] sm:$0xff]
    %v220 = vld [vmem:[#allocation5 + $0x78] sm:$0xff]
    %v221 = vld [vmem:[%s2] sm:$0x1]
    %v223 = vlaneseq
    %v224 = vshrl.u32 %v223, 7
    %v225 = vsub.s32 0, %v224
    %v226 = vrot.slane %v221, %v225
    %228 = vmatprep.subr.mxu0 0.0
    %229 = vmatpush1.msra.mxu0 %v205
    %230 = vmatprep.subr.mxu0 0.0
    %231 = vmatpush1.msra.mxu0 %v206
    %232 = vmatprep.subr.mxu0 0.0
    %233 = vmatpush1.msra.mxu0 %v207
    %234 = vmatprep.subr.mxu0 0.0
    %235 = vmatpush1.msra.mxu0 %v208
    %236 = vmatprep.subr.mxu0 0.0
    %237 = vmatpush1.msra.mxu0 %v209
    %238 = vmatprep.subr.mxu0 0.0
    %239 = vmatpush1.msra.mxu0 %v210
    %240 = vmatprep.subr.mxu0 0.0
    %241 = vmatpush1.msra.mxu0 %v211
    %242 = vmatprep.subr.mxu0 0.0
    %243 = vmatpush1.msra.mxu0 %v212
    %244 = vmatprep.subr.mxu0 0.0
    %245 = vmatpush1.msra.mxu0 %v213
    %246 = vmatprep.subr.mxu0 0.0
    %247 = vmatpush1.msra.mxu0 %v214
    %248 = vmatprep.subr.mxu0 0.0
    %249 = vmatpush1.msra.mxu0 %v215
    %250 = vmatprep.subr.mxu0 0.0
    %251 = vmatpush1.msra.mxu0 %v216
    %252 = vmatprep.subr.mxu0 0.0
    %253 = vmatpush1.msra.mxu0 %v217
    %254 = vmatprep.subr.mxu0 0.0
    %255 = vmatpush1.msra.mxu0 %v218
    %256 = vmatprep.subr.mxu0 0.0
    %257 = vmatpush1.msra.mxu0 %v219
    %258 = vmatprep.subr.mxu0 0.0
    %259 = vmatpush1.msra.mxu0 %v220
    %260 = vmatprep.subr.mxu0 0.0
    %261 = vmatpush1.msra.mxu0 0.0
    %262 = vmatprep.subr.mxu0 0.0
    %263 = vmatpush1.msra.mxu0 0.0
    %264 = vmatprep.subr.mxu0 0.0
    %265 = vmatpush1.msra.mxu0 0.0
    %266 = vmatprep.subr.mxu0 0.0
    %267 = vmatpush1.msra.mxu0 0.0
    %268 = vmatprep.subr.mxu0 0.0
    %269 = vmatpush1.msra.mxu0 0.0
    %270 = vmatprep.subr.mxu0 0.0
    %271 = vmatpush1.msra.mxu0 0.0
    %272 = vmatprep.subr.mxu0 0.0
    %273 = vmatpush1.msra.mxu0 0.0
    %274 = vmatprep.subr.mxu0 0.0
    %275 = vmatpush1.msra.mxu0 0.0
    %276 = vmatprep.subr.mxu0 0.0
    %277 = vmatpush1.msra.mxu0 0.0
    %278 = vmatprep.subr.mxu0 0.0
    %279 = vmatpush1.msra.mxu0 0.0
    %280 = vmatprep.subr.mxu0 0.0
    %281 = vmatpush1.msra.mxu0 0.0
    %282 = vmatprep.subr.mxu0 0.0
    %283 = vmatpush1.msra.mxu0 0.0
    %284 = vmatprep.subr.mxu0 0.0
    %285 = vmatpush1.msra.mxu0 0.0
    %286 = vmatprep.subr.mxu0 0.0
    %287 = vmatpush1.msra.mxu0 0.0
    %288 = vmatprep.subr.mxu0 0.0
    %289 = vmatpush1.msra.mxu0 0.0
    %290 = vmatprep.subr.mxu0 0.0
    %291 = vmatpush1.msra.mxu0 0.0
    %292 = vmatprep.mubr.f32.mxu0 0.0
    %293 = vmatmul.mubr.f32.gmra.mrb[0].mxu0 %v107
    %v294 = vpop.f32.mrb[0].mxu0
    %v295 = vadd.f32 %v226, %v294
    %v296 = vpop.f32.mrb[0].mxu0
    %297 = vmatprep.mubr.f32.mxu0 0.0
    %298 = vmatmul.mubr.f32.gmra.mrb[0].mxu0 %v108
    %v299 = vpop.f32.mrb[0].mxu0
    %v300 = vadd.f32 %v226, %v299
    %v301 = vpop.f32.mrb[0].mxu0
    %302 = vdwg.mxu0
    %v303 = vld [vmem:[%s3] sm:$0x1]
    %v304 = vld [vmem:[%s4] sm:$0x1]
    %305 = vadd.xlane.f32.xlu0 %v295
    %v306 = vpop.xlane.xlu0 %305
    %307 = vadd.xlane.f32.xlu0 %v300
    %v308 = vpop.xlane.xlu0 %307
    %v309 = vmul.f32 %v306, 0.03125
    %v310 = vmul.f32 %v308, 0.03125
    %v311 = vmul.f32 %v295, %v295
    %v312 = vmul.f32 %v300, %v300
    %313 = vadd.xlane.f32.xlu0 %v311
    %v314 = vpop.xlane.xlu0 %313
    %315 = vadd.xlane.f32.xlu0 %v312
    %v316 = vpop.xlane.xlu0 %315
    %v317 = vmul.f32 %v314, 0.03125
    %v318 = vmul.f32 %v316, 0.03125
    %v319 = vmul.f32 %v309, %v309
    %v320 = vmul.f32 %v310, %v310
    %v321 = vsub.f32 %v317, %v319
    %v322 = vsub.f32 %v318, %v320
    %v323 = vsub.f32 %v295, %v309
    %v324 = vsub.f32 %v300, %v310
    %v325 = vadd.f32 %v321, 1e-05
    %v326 = vadd.f32 %v322, 1e-05
    %v327 = vrsqrt.pop %v325
    %v328 = vrsqrt.pop %v326
    %v329 = vmul.f32 %v323, %v327
    %v330 = vmul.f32 %v324, %v328
    %v332 = vlaneseq
    %v333 = vshrl.u32 %v332, 7
    %v334 = vsub.s32 0, %v333
    %v335 = vrot.slane %v303, %v334
    %v337 = vmul.f32 %v329, %v335
    %v338 = vmul.f32 %v330, %v335
    %v340 = vlaneseq
    %v341 = vshrl.u32 %v340, 7
    %v342 = vsub.s32 0, %v341
    %v343 = vrot.slane %v304, %v342
    %v345 = vadd.f32 %v337, %v343
    %v346 = vadd.f32 %v338, %v343
    %v347 = vmax.f32 %v345, 0.0
    %v348 = vmax.f32 %v346, 0.0
    %v349 = vld [vmem:[#allocation7] sm:$0xff]
    %v350 = vld [vmem:[#allocation7 + $0x8] sm:$0xff]
    %v351 = vld [vmem:[#allocation7 + $0x10] sm:$0xff]
    %v352 = vld [vmem:[#allocation7 + $0x18] sm:$0xff]
    %v353 = vld [vmem:[#allocation7 + $0x20] sm:$0xff]
    %v354 = vld [vmem:[#allocation7 + $0x28] sm:$0xff]
    %v355 = vld [vmem:[#allocation7 + $0x30] sm:$0xff]
    %v356 = vld [vmem:[#allocation7 + $0x38] sm:$0xff]
    %v357 = vld [vmem:[#allocation7 + $0x40] sm:$0xff]
    %v358 = vld [vmem:[#allocation7 + $0x48] sm:$0xff]
    %v359 = vld [vmem:[#allocation7 + $0x50] sm:$0xff]
    %v360 = vld [vmem:[#allocation7 + $0x58] sm:$0xff]
    %v361 = vld [vmem:[#allocation7 + $0x60] sm:$0xff]
    %v362 = vld [vmem:[#allocation7 + $0x68] sm:$0xff]
    %v363 = vld [vmem:[#allocation7 + $0x70] sm:$0xff]
    %v364 = vld [vmem:[#allocation7 + $0x78] sm:$0xff]
    %v365 = vld [vmem:[#allocation7 + $0x80] sm:$0xff]
    %v366 = vld [vmem:[#allocation7 + $0x88] sm:$0xff]
    %v367 = vld [vmem:[#allocation7 + $0x90] sm:$0xff]
    %v368 = vld [vmem:[#allocation7 + $0x98] sm:$0xff]
    %v369 = vld [vmem:[#allocation7 + $0xa0] sm:$0xff]
    %v370 = vld [vmem:[#allocation7 + $0xa8] sm:$0xff]
    %v371 = vld [vmem:[#allocation7 + $0xb0] sm:$0xff]
    %v372 = vld [vmem:[#allocation7 + $0xb8] sm:$0xff]
    %v373 = vld [vmem:[#allocation7 + $0xc0] sm:$0xff]
    %v374 = vld [vmem:[#allocation7 + $0xc8] sm:$0xff]
    %v375 = vld [vmem:[#allocation7 + $0xd0] sm:$0xff]
    %v376 = vld [vmem:[#allocation7 + $0xd8] sm:$0xff]
    %v377 = vld [vmem:[#allocation7 + $0xe0] sm:$0xff]
    %v378 = vld [vmem:[#allocation7 + $0xe8] sm:$0xff]
    %v379 = vld [vmem:[#allocation7 + $0xf0] sm:$0xff]
    %v380 = vld [vmem:[#allocation7 + $0xf8] sm:$0xff]
    %v381 = vld [vmem:[#allocation7 + $0x100] sm:$0xff]
    %v382 = vld [vmem:[#allocation7 + $0x108] sm:$0xff]
    %v383 = vld [vmem:[#allocation7 + $0x110] sm:$0xff]
    %v384 = vld [vmem:[#allocation7 + $0x118] sm:$0xff]
    %v385 = vld [vmem:[#allocation7 + $0x120] sm:$0xff]
    %v386 = vld [vmem:[#allocation7 + $0x128] sm:$0xff]
    %v387 = vld [vmem:[#allocation7 + $0x130] sm:$0xff]
    %v388 = vld [vmem:[#allocation7 + $0x138] sm:$0xff]
    %v389 = vld [vmem:[#allocation7 + $0x140] sm:$0xff]
    %v390 = vld [vmem:[#allocation7 + $0x148] sm:$0xff]
    %v391 = vld [vmem:[#allocation7 + $0x150] sm:$0xff]
    %v392 = vld [vmem:[#allocation7 + $0x158] sm:$0xff]
    %v393 = vld [vmem:[#allocation7 + $0x160] sm:$0xff]
    %v394 = vld [vmem:[#allocation7 + $0x168] sm:$0xff]
    %v395 = vld [vmem:[#allocation7 + $0x170] sm:$0xff]
    %v396 = vld [vmem:[#allocation7 + $0x178] sm:$0xff]
    %v397 = vld [vmem:[#allocation7 + $0x180] sm:$0xff]
    %v398 = vld [vmem:[#allocation7 + $0x188] sm:$0xff]
    %v399 = vld [vmem:[#allocation7 + $0x190] sm:$0xff]
    %v400 = vld [vmem:[#allocation7 + $0x198] sm:$0xff]
    %v401 = vld [vmem:[#allocation7 + $0x1a0] sm:$0xff]
    %v402 = vld [vmem:[#allocation7 + $0x1a8] sm:$0xff]
    %v403 = vld [vmem:[#allocation7 + $0x1b0] sm:$0xff]
    %v404 = vld [vmem:[#allocation7 + $0x1b8] sm:$0xff]
    %v405 = vld [vmem:[#allocation7 + $0x1c0] sm:$0xff]
    %v406 = vld [vmem:[#allocation7 + $0x1c8] sm:$0xff]
    %v407 = vld [vmem:[#allocation7 + $0x1d0] sm:$0xff]
    %v408 = vld [vmem:[#allocation7 + $0x1d8] sm:$0xff]
    %v409 = vld [vmem:[#allocation7 + $0x1e0] sm:$0xff]
    %v410 = vld [vmem:[#allocation7 + $0x1e8] sm:$0xff]
    %v411 = vld [vmem:[#allocation7 + $0x1f0] sm:$0xff]
    %v412 = vld [vmem:[#allocation7 + $0x1f8] sm:$0xff]
    %v413 = vld [vmem:[#allocation7 + $0x200] sm:$0xff]
    %v414 = vld [vmem:[#allocation7 + $0x208] sm:$0xff]
    %v415 = vld [vmem:[#allocation7 + $0x210] sm:$0xff]
    %v416 = vld [vmem:[#allocation7 + $0x218] sm:$0xff]
    %v417 = vld [vmem:[#allocation7 + $0x220] sm:$0xff]
    %v418 = vld [vmem:[#allocation7 + $0x228] sm:$0xff]
    %v419 = vld [vmem:[#allocation7 + $0x230] sm:$0xff]
    %v420 = vld [vmem:[#allocation7 + $0x238] sm:$0xff]
    %v421 = vld [vmem:[#allocation7 + $0x240] sm:$0xff]
    %v422 = vld [vmem:[#allocation7 + $0x248] sm:$0xff]
    %v423 = vld [vmem:[#allocation7 + $0x250] sm:$0xff]
    %v424 = vld [vmem:[#allocation7 + $0x258] sm:$0xff]
    %v425 = vld [vmem:[#allocation7 + $0x260] sm:$0xff]
    %v426 = vld [vmem:[#allocation7 + $0x268] sm:$0xff]
    %v427 = vld [vmem:[#allocation7 + $0x270] sm:$0xff]
    %v428 = vld [vmem:[#allocation7 + $0x278] sm:$0xff]
    %v429 = vld [vmem:[#allocation7 + $0x280] sm:$0xff]
    %v430 = vld [vmem:[#allocation7 + $0x288] sm:$0xff]
    %v431 = vld [vmem:[#allocation7 + $0x290] sm:$0xff]
    %v432 = vld [vmem:[#allocation7 + $0x298] sm:$0xff]
    %v433 = vld [vmem:[#allocation7 + $0x2a0] sm:$0xff]
    %v434 = vld [vmem:[#allocation7 + $0x2a8] sm:$0xff]
    %v435 = vld [vmem:[#allocation7 + $0x2b0] sm:$0xff]
    %v436 = vld [vmem:[#allocation7 + $0x2b8] sm:$0xff]
    %v437 = vld [vmem:[#allocation7 + $0x2c0] sm:$0xff]
    %v438 = vld [vmem:[#allocation7 + $0x2c8] sm:$0xff]
    %v439 = vld [vmem:[#allocation7 + $0x2d0] sm:$0xff]
    %v440 = vld [vmem:[#allocation7 + $0x2d8] sm:$0xff]
    %v441 = vld [vmem:[#allocation7 + $0x2e0] sm:$0xff]
    %v442 = vld [vmem:[#allocation7 + $0x2e8] sm:$0xff]
    %v443 = vld [vmem:[#allocation7 + $0x2f0] sm:$0xff]
    %v444 = vld [vmem:[#allocation7 + $0x2f8] sm:$0xff]
    %v445 = vld [vmem:[%s6] sm:$0x3f]
    %v447 = vlaneseq
    %v448 = vshrl.u32 %v447, 7
    %v449 = vsub.s32 0, %v448
    %v450 = vrot.slane %v445, %v449
    %v451 = vlaneseq
    %v452 = vshrl.u32 %v451, 7
    %v453 = vsub.s32 1, %v452
    %v454 = vrot.slane %v445, %v453
    %v455 = vlaneseq
    %v456 = vshrl.u32 %v455, 7
    %v457 = vsub.s32 2, %v456
    %v458 = vrot.slane %v445, %v457
    %v459 = vlaneseq
    %v460 = vshrl.u32 %v459, 7
    %v461 = vsub.s32 3, %v460
    %v462 = vrot.slane %v445, %v461
    %v463 = vlaneseq
    %v464 = vshrl.u32 %v463, 7
    %v465 = vsub.s32 4, %v464
    %v466 = vrot.slane %v445, %v465
    %v467 = vlaneseq
    %v468 = vshrl.u32 %v467, 7
    %v469 = vsub.s32 5, %v468
    %v470 = vrot.slane %v445, %v469
    %477 = vmatprep.subr.mxu0 %v350
    %478 = vmatpush1.msra.mxu0 %v349
    %479 = vmatprep.subr.mxu0 %v356
    %480 = vmatpush1.msra.mxu0 %v355
    %481 = vmatprep.subr.mxu0 %v362
    %482 = vmatpush1.msra.mxu0 %v361
    %483 = vmatprep.subr.mxu0 %v368
    %484 = vmatpush1.msra.mxu0 %v367
    %485 = vmatprep.subr.mxu0 %v374
    %486 = vmatpush1.msra.mxu0 %v373
    %487 = vmatprep.subr.mxu0 %v380
    %488 = vmatpush1.msra.mxu0 %v379
    %489 = vmatprep.subr.mxu0 %v386
    %490 = vmatpush1.msra.mxu0 %v385
    %491 = vmatprep.subr.mxu0 %v392
    %492 = vmatpush1.msra.mxu0 %v391
    %493 = vmatprep.subr.mxu0 %v398
    %494 = vmatpush1.msra.mxu0 %v397
    %495 = vmatprep.subr.mxu0 %v404
    %496 = vmatpush1.msra.mxu0 %v403
    %497 = vmatprep.subr.mxu0 %v410
    %498 = vmatpush1.msra.mxu0 %v409
    %499 = vmatprep.subr.mxu0 %v416
    %500 = vmatpush1.msra.mxu0 %v415
    %501 = vmatprep.subr.mxu0 %v422
    %502 = vmatpush1.msra.mxu0 %v421
    %503 = vmatprep.subr.mxu0 %v428
    %504 = vmatpush1.msra.mxu0 %v427
    %505 = vmatprep.subr.mxu0 %v434
    %506 = vmatpush1.msra.mxu0 %v433
    %507 = vmatprep.subr.mxu0 %v440
    %508 = vmatpush1.msra.mxu0 %v439
    %509 = vmatprep.subr.mxu0 0.0
    %510 = vmatpush1.msra.mxu0 0.0
    %511 = vmatprep.subr.mxu0 0.0
    %512 = vmatpush1.msra.mxu0 0.0
    %513 = vmatprep.subr.mxu0 0.0
    %514 = vmatpush1.msra.mxu0 0.0
    %515 = vmatprep.subr.mxu0 0.0
    %516 = vmatpush1.msra.mxu0 0.0
    %517 = vmatprep.subr.mxu0 0.0
    %518 = vmatpush1.msra.mxu0 0.0
    %519 = vmatprep.subr.mxu0 0.0
    %520 = vmatpush1.msra.mxu0 0.0
    %521 = vmatprep.subr.mxu0 0.0
    %522 = vmatpush1.msra.mxu0 0.0
    %523 = vmatprep.subr.mxu0 0.0
    %524 = vmatpush1.msra.mxu0 0.0
    %525 = vmatprep.subr.mxu0 0.0
    %526 = vmatpush1.msra.mxu0 0.0
    %527 = vmatprep.subr.mxu0 0.0
    %528 = vmatpush1.msra.mxu0 0.0
    %529 = vmatprep.subr.mxu0 0.0
    %530 = vmatpush1.msra.mxu0 0.0
    %531 = vmatprep.subr.mxu0 0.0
    %532 = vmatpush1.msra.mxu0 0.0
    %533 = vmatprep.subr.mxu0 0.0
    %534 = vmatpush1.msra.mxu0 0.0
    %535 = vmatprep.subr.mxu0 0.0
    %536 = vmatpush1.msra.mxu0 0.0
    %537 = vmatprep.subr.mxu0 0.0
    %538 = vmatpush1.msra.mxu0 0.0
    %539 = vmatprep.subr.mxu0 0.0
    %540 = vmatpush1.msra.mxu0 0.0
    %541 = vmatprep.mubr.f32.mxu0 0.0
    %542 = vmatmul.mubr.f32.gmra.mrb[0].mxu0 %v347
    %v543 = vpop.f32.mrb[0].mxu0
    %v544 = vadd.f32 %v450, %v543
    %v545 = vpop.f32.mrb[0].mxu0
    %v546 = vadd.f32 %v454, %v545
    %547 = vmatprep.mubr.f32.mxu0 0.0
    %548 = vmatmul.mubr.f32.gmra.mrb[0].mxu0 %v348
    %v549 = vpop.f32.mrb[0].mxu0
    %v550 = vadd.f32 %v450, %v549
    %v551 = vpop.f32.mrb[0].mxu0
    %v552 = vadd.f32 %v454, %v551
    %553 = vdwg.mxu0
    %554 = vmatprep.subr.mxu0 %v352
    %555 = vmatpush1.msra.mxu0 %v351
    %556 = vmatprep.subr.mxu0 %v358
    %557 = vmatpush1.msra.mxu0 %v357
    %558 = vmatprep.subr.mxu0 %v364
    %559 = vmatpush1.msra.mxu0 %v363
    %560 = vmatprep.subr.mxu0 %v370
    %561 = vmatpush1.msra.mxu0 %v369
    %562 = vmatprep.subr.mxu0 %v376
    %563 = vmatpush1.msra.mxu0 %v375
    %564 = vmatprep.subr.mxu0 %v382
    %565 = vmatpush1.msra.mxu0 %v381
    %566 = vmatprep.subr.mxu0 %v388
    %567 = vmatpush1.msra.mxu0 %v387
    %568 = vmatprep.subr.mxu0 %v394
    %569 = vmatpush1.msra.mxu0 %v393
    %570 = vmatprep.subr.mxu0 %v400
    %571 = vmatpush1.msra.mxu0 %v399
    %572 = vmatprep.subr.mxu0 %v406
    %573 = vmatpush1.msra.mxu0 %v405
    %574 = vmatprep.subr.mxu0 %v412
    %575 = vmatpush1.msra.mxu0 %v411
    %576 = vmatprep.subr.mxu0 %v418
    %577 = vmatpush1.msra.mxu0 %v417
    %578 = vmatprep.subr.mxu0 %v424
    %579 = vmatpush1.msra.mxu0 %v423
    %580 = vmatprep.subr.mxu0 %v430
    %581 = vmatpush1.msra.mxu0 %v429
    %582 = vmatprep.subr.mxu0 %v436
    %583 = vmatpush1.msra.mxu0 %v435
    %584 = vmatprep.subr.mxu0 %v442
    %585 = vmatpush1.msra.mxu0 %v441
    %586 = vmatprep.subr.mxu0 0.0
    %587 = vmatpush1.msra.mxu0 0.0
    %588 = vmatprep.subr.mxu0 0.0
    %589 = vmatpush1.msra.mxu0 0.0
    %590 = vmatprep.subr.mxu0 0.0
    %591 = vmatpush1.msra.mxu0 0.0
    %592 = vmatprep.subr.mxu0 0.0
    %593 = vmatpush1.msra.mxu0 0.0
    %594 = vmatprep.subr.mxu0 0.0
    %595 = vmatpush1.msra.mxu0 0.0
    %596 = vmatprep.subr.mxu0 0.0
    %597 = vmatpush1.msra.mxu0 0.0
    %598 = vmatprep.subr.mxu0 0.0
    %599 = vmatpush1.msra.mxu0 0.0
    %600 = vmatprep.subr.mxu0 0.0
    %601 = vmatpush1.msra.mxu0 0.0
    %602 = vmatprep.subr.mxu0 0.0
    %603 = vmatpush1.msra.mxu0 0.0
    %604 = vmatprep.subr.mxu0 0.0
    %605 = vmatpush1.msra.mxu0 0.0
    %606 = vmatprep.subr.mxu0 0.0
    %607 = vmatpush1.msra.mxu0 0.0
    %608 = vmatprep.subr.mxu0 0.0
    %609 = vmatpush1.msra.mxu0 0.0
    %610 = vmatprep.subr.mxu0 0.0
    %611 = vmatpush1.msra.mxu0 0.0
    %612 = vmatprep.subr.mxu0 0.0
    %613 = vmatpush1.msra.mxu0 0.0
    %614 = vmatprep.subr.mxu0 0.0
    %615 = vmatpush1.msra.mxu0 0.0
    %616 = vmatprep.subr.mxu0 0.0
    %617 = vmatpush1.msra.mxu0 0.0
    %618 = vmatprep.mubr.f32.mxu0 0.0
    %619 = vmatmul.mubr.f32.gmra.mrb[0].mxu0 %v347
    %v620 = vpop.f32.mrb[0].mxu0
    %v621 = vadd.f32 %v458, %v620
    %v622 = vpop.f32.mrb[0].mxu0
    %v623 = vadd.f32 %v462, %v622
    %624 = vmatprep.mubr.f32.mxu0 0.0
    %625 = vmatmul.mubr.f32.gmra.mrb[0].mxu0 %v348
    %v626 = vpop.f32.mrb[0].mxu0
    %v627 = vadd.f32 %v458, %v626
    %v628 = vpop.f32.mrb[0].mxu0
    %v629 = vadd.f32 %v462, %v628
    %630 = vdwg.mxu0
    %631 = vmatprep.subr.mxu0 %v354
    %632 = vmatpush1.msra.mxu0 %v353
    %633 = vmatprep.subr.mxu0 %v360
    %634 = vmatpush1.msra.mxu0 %v359
    %635 = vmatprep.subr.mxu0 %v366
    %636 = vmatpush1.msra.mxu0 %v365
    %637 = vmatprep.subr.mxu0 %v372
    %638 = vmatpush1.msra.mxu0 %v371
    %639 = vmatprep.subr.mxu0 %v378
    %640 = vmatpush1.msra.mxu0 %v377
    %641 = vmatprep.subr.mxu0 %v384
    %642 = vmatpush1.msra.mxu0 %v383
    %643 = vmatprep.subr.mxu0 %v390
    %644 = vmatpush1.msra.mxu0 %v389
    %645 = vmatprep.subr.mxu0 %v396
    %646 = vmatpush1.msra.mxu0 %v395
    %647 = vmatprep.subr.mxu0 %v402
    %648 = vmatpush1.msra.mxu0 %v401
    %649 = vmatprep.subr.mxu0 %v408
    %650 = vmatpush1.msra.mxu0 %v407
    %651 = vmatprep.subr.mxu0 %v414
    %652 = vmatpush1.msra.mxu0 %v413
    %653 = vmatprep.subr.mxu0 %v420
    %654 = vmatpush1.msra.mxu0 %v419
    %655 = vmatprep.subr.mxu0 %v426
    %656 = vmatpush1.msra.mxu0 %v425
    %657 = vmatprep.subr.mxu0 %v432
    %658 = vmatpush1.msra.mxu0 %v431
    %659 = vmatprep.subr.mxu0 %v438
    %660 = vmatpush1.msra.mxu0 %v437
    %661 = vmatprep.subr.mxu0 %v444
    %662 = vmatpush1.msra.mxu0 %v443
    %663 = vmatprep.subr.mxu0 0.0
    %664 = vmatpush1.msra.mxu0 0.0
    %665 = vmatprep.subr.mxu0 0.0
    %666 = vmatpush1.msra.mxu0 0.0
    %667 = vmatprep.subr.mxu0 0.0
    %668 = vmatpush1.msra.mxu0 0.0
    %669 = vmatprep.subr.mxu0 0.0
    %670 = vmatpush1.msra.mxu0 0.0
    %671 = vmatprep.subr.mxu0 0.0
    %672 = vmatpush1.msra.mxu0 0.0
    %673 = vmatprep.subr.mxu0 0.0
    %674 = vmatpush1.msra.mxu0 0.0
    %675 = vmatprep.subr.mxu0 0.0
    %676 = vmatpush1.msra.mxu0 0.0
    %677 = vmatprep.subr.mxu0 0.0
    %678 = vmatpush1.msra.mxu0 0.0
    %679 = vmatprep.subr.mxu0 0.0
    %680 = vmatpush1.msra.mxu0 0.0
    %681 = vmatprep.subr.mxu0 0.0
    %682 = vmatpush1.msra.mxu0 0.0
    %683 = vmatprep.subr.mxu0 0.0
    %684 = vmatpush1.msra.mxu0 0.0
    %685 = vmatprep.subr.mxu0 0.0
    %686 = vmatpush1.msra.mxu0 0.0
    %687 = vmatprep.subr.mxu0 0.0
    %688 = vmatpush1.msra.mxu0 0.0
    %689 = vmatprep.subr.mxu0 0.0
    %690 = vmatpush1.msra.mxu0 0.0
    %691 = vmatprep.subr.mxu0 0.0
    %692 = vmatpush1.msra.mxu0 0.0
    %693 = vmatprep.subr.mxu0 0.0
    %694 = vmatpush1.msra.mxu0 0.0
    %695 = vmatprep.mubr.f32.mxu0 0.0
    %696 = vmatmul.mubr.f32.gmra.mrb[0].mxu0 %v347
    %v697 = vpop.f32.mrb[0].mxu0
    %v698 = vadd.f32 %v466, %v697
    %v699 = vpop.f32.mrb[0].mxu0
    %v700 = vadd.f32 %v470, %v699
    %701 = vmatprep.mubr.f32.mxu0 0.0
    %702 = vmatmul.mubr.f32.gmra.mrb[0].mxu0 %v348
    %v703 = vpop.f32.mrb[0].mxu0
    %v704 = vadd.f32 %v466, %v703
    %v705 = vpop.f32.mrb[0].mxu0
    %v706 = vadd.f32 %v470, %v705
    %707 = vdwg.mxu0
    %v708 = vmul.f32 %v544, %v544
    %v709 = vmul.f32 %v546, %v546
    %v710 = vmul.f32 %v550, %v550
    %v711 = vmul.f32 %v552, %v552
    %v712 = vadd.f32 %v708, %v709
    %v713 = vadd.f32 %v712, %v710
    %v714 = vadd.f32 %v713, %v711
    %715 = vadd.xlane.f32.xlu0 %v714
    %v716 = vpop.xlane.xlu0 %715
    %v717 = vrot.slane %v716, 4
    %v718 = vadd.f32 %v716, %v717
    %v719 = vrot.slane %v718, 2
    %v720 = vadd.f32 %v718, %v719
    %v721 = vrot.slane %v720, 1
    %v722 = vadd.f32 %v720, %v721
    %s723 = vtos %v722
    %v724 = vstv %s723
    %v725 = vrsqrt.pop %v724
    %s726 = vtos %v725
    %v727 = vstv %s726
    %v728 = vmul.f32 %v544, %v727
    %v729 = vmul.f32 %v546, %v727
    %v730 = vmul.f32 %v550, %v727
    %v731 = vmul.f32 %v552, %v727
    %v732 = vmul.f32 %v621, %v621
    %v733 = vmul.f32 %v623, %v623
    %v734 = vmul.f32 %v627, %v627
    %v735 = vmul.f32 %v629, %v629
    %v736 = vadd.f32 %v732, %v733
    %v737 = vadd.f32 %v736, %v734
    %v738 = vadd.f32 %v737, %v735
    %739 = vadd.xlane.f32.xlu0 %v738
    %v740 = vpop.xlane.xlu0 %739
    %v741 = vrot.slane %v740, 4
    %v742 = vadd.f32 %v740, %v741
    %v743 = vrot.slane %v742, 2
    %v744 = vadd.f32 %v742, %v743
    %v745 = vrot.slane %v744, 1
    %v746 = vadd.f32 %v744, %v745
    %s747 = vtos %v746
    %v748 = vstv %s747
    %v749 = vrsqrt.pop %v748
    %s750 = vtos %v749
    %v751 = vstv %s750
    %v752 = vmul.f32 %v621, %v751
    %v753 = vmul.f32 %v623, %v751
    %v754 = vmul.f32 %v627, %v751
    %v755 = vmul.f32 %v629, %v751
    %756 = vxpose.xlu0.b32.start [1/16] %v752, 128
    %757 = vxpose.xlu0.b32.cont [2/16] %v754, 128
    %758 = vxpose.xlu0.b32.cont [3/16] 0.0, 128
    %759 = vxpose.xlu0.b32.cont [4/16] 0.0, 128
    %760 = vxpose.xlu0.b32.cont [5/16] 0.0, 128
    %761 = vxpose.xlu0.b32.cont [6/16] 0.0, 128
    %762 = vxpose.xlu0.b32.cont [7/16] 0.0, 128
    %763 = vxpose.xlu0.b32.cont [8/16] 0.0, 128
    %764 = vxpose.xlu0.b32.cont [9/16] 0.0, 128
    %765 = vxpose.xlu0.b32.cont [10/16] 0.0, 128
    %766 = vxpose.xlu0.b32.cont [11/16] 0.0, 128
    %767 = vxpose.xlu0.b32.cont [12/16] 0.0, 128
    %768 = vxpose.xlu0.b32.cont [13/16] 0.0, 128
    %769 = vxpose.xlu0.b32.cont [14/16] 0.0, 128
    %770 = vxpose.xlu0.b32.cont [15/16] 0.0, 128
    %771 = vxpose.xlu0.b32.end [16/16] 0.0, 128
    %v772 = vpop.trf.xlu0
    %v773 = vpop.trf.xlu0
    %v774 = vpop.trf.xlu0
    %v775 = vpop.trf.xlu0
    %v776 = vpop.trf.xlu0
    %v777 = vpop.trf.xlu0
    %v778 = vpop.trf.xlu0
    %v779 = vpop.trf.xlu0
    %v780 = vpop.trf.xlu0
    %v781 = vpop.trf.xlu0
    %v782 = vpop.trf.xlu0
    %v783 = vpop.trf.xlu0
    %v784 = vpop.trf.xlu0
    %v785 = vpop.trf.xlu0
    %v786 = vpop.trf.xlu0
    %v787 = vpop.trf.xlu0
    %788 = vxpose.xlu0.b32.start [1/16] %v753, 128
    %789 = vxpose.xlu0.b32.cont [2/16] %v755, 128
    %790 = vxpose.xlu0.b32.cont [3/16] 0.0, 128
    %791 = vxpose.xlu0.b32.cont [4/16] 0.0, 128
    %792 = vxpose.xlu0.b32.cont [5/16] 0.0, 128
    %793 = vxpose.xlu0.b32.cont [6/16] 0.0, 128
    %794 = vxpose.xlu0.b32.cont [7/16] 0.0, 128
    %795 = vxpose.xlu0.b32.cont [8/16] 0.0, 128
    %796 = vxpose.xlu0.b32.cont [9/16] 0.0, 128
    %797 = vxpose.xlu0.b32.cont [10/16] 0.0, 128
    %798 = vxpose.xlu0.b32.cont [11/16] 0.0, 128
    %799 = vxpose.xlu0.b32.cont [12/16] 0.0, 128
    %800 = vxpose.xlu0.b32.cont [13/16] 0.0, 128
    %801 = vxpose.xlu0.b32.cont [14/16] 0.0, 128
    %802 = vxpose.xlu0.b32.cont [15/16] 0.0, 128
    %803 = vxpose.xlu0.b32.end [16/16] 0.0, 128
    %v804 = vpop.trf.xlu0
    %v805 = vpop.trf.xlu0
    %v806 = vpop.trf.xlu0
    %v807 = vpop.trf.xlu0
    %v808 = vpop.trf.xlu0
    %v809 = vpop.trf.xlu0
    %v810 = vpop.trf.xlu0
    %v811 = vpop.trf.xlu0
    %v812 = vpop.trf.xlu0
    %v813 = vpop.trf.xlu0
    %v814 = vpop.trf.xlu0
    %v815 = vpop.trf.xlu0
    %v816 = vpop.trf.xlu0
    %v817 = vpop.trf.xlu0
    %v818 = vpop.trf.xlu0
    %v819 = vpop.trf.xlu0
    %vm820 = vcmask 130048
    %v822 = vsel %vm820, %v772, 0
    %v825 = vsel %vm820, %v773, 0
    %v828 = vsel %vm820, %v774, 0
    %v831 = vsel %vm820, %v775, 0
    %v834 = vsel %vm820, %v776, 0
    %v837 = vsel %vm820, %v777, 0
    %v840 = vsel %vm820, %v778, 0
    %v843 = vsel %vm820, %v779, 0
    %v846 = vsel %vm820, %v780, 0
    %v849 = vsel %vm820, %v781, 0
    %v852 = vsel %vm820, %v782, 0
    %v855 = vsel %vm820, %v783, 0
    %v858 = vsel %vm820, %v784, 0
    %v861 = vsel %vm820, %v785, 0
    %v864 = vsel %vm820, %v786, 0
    %v867 = vsel %vm820, %v787, 0
    %v870 = vsel %vm820, %v804, 0
    %v873 = vsel %vm820, %v805, 0
    %v876 = vsel %vm820, %v806, 0
    %v879 = vsel %vm820, %v807, 0
    %v882 = vsel %vm820, %v808, 0
    %v885 = vsel %vm820, %v809, 0
    %v888 = vsel %vm820, %v810, 0
    %v891 = vsel %vm820, %v811, 0
    %v894 = vsel %vm820, %v812, 0
    %v897 = vsel %vm820, %v813, 0
    %v900 = vsel %vm820, %v814, 0
    %v903 = vsel %vm820, %v815, 0
    %v906 = vsel %vm820, %v816, 0
    %v909 = vsel %vm820, %v817, 0
    %v912 = vsel %vm820, %v818, 0
    %v915 = vsel %vm820, %v819, 0
    %917 = vmatprep.subr.mxu0 %v700
    %918 = vmatpush1.msra.mxu0 %v698
    %919 = vmatprep.subr.mxu0 %v706
    %920 = vmatpush1.msra.mxu0 %v704
    %921 = vmatprep.subr.mxu0 0.0
    %922 = vmatpush1.msra.mxu0 0.0
    %923 = vmatprep.subr.mxu0 0.0
    %924 = vmatpush1.msra.mxu0 0.0
    %925 = vmatprep.subr.mxu0 0.0
    %926 = vmatpush1.msra.mxu0 0.0
    %927 = vmatprep.subr.mxu0 0.0
    %928 = vmatpush1.msra.mxu0 0.0
    %929 = vmatprep.subr.mxu0 0.0
    %930 = vmatpush1.msra.mxu0 0.0
    %931 = vmatprep.subr.mxu0 0.0
    %932 = vmatpush1.msra.mxu0 0.0
    %933 = vmatprep.subr.mxu0 0.0
    %934 = vmatpush1.msra.mxu0 0.0
    %935 = vmatprep.subr.mxu0 0.0
    %936 = vmatpush1.msra.mxu0 0.0
    %937 = vmatprep.subr.mxu0 0.0
    %938 = vmatpush1.msra.mxu0 0.0
    %939 = vmatprep.subr.mxu0 0.0
    %940 = vmatpush1.msra.mxu0 0.0
    %941 = vmatprep.subr.mxu0 0.0
    %942 = vmatpush1.msra.mxu0 0.0
    %943 = vmatprep.subr.mxu0 0.0
    %944 = vmatpush1.msra.mxu0 0.0
    %945 = vmatprep.subr.mxu0 0.0
    %946 = vmatpush1.msra.mxu0 0.0
    %947 = vmatprep.subr.mxu0 0.0
    %948 = vmatpush1.msra.mxu0 0.0
    %949 = vmatprep.subr.mxu0 0.0
    %950 = vmatpush1.msra.mxu0 0.0
    %951 = vmatprep.subr.mxu0 0.0
    %952 = vmatpush1.msra.mxu0 0.0
    %953 = vmatprep.subr.mxu0 0.0
    %954 = vmatpush1.msra.mxu0 0.0
    %955 = vmatprep.subr.mxu0 0.0
    %956 = vmatpush1.msra.mxu0 0.0
    %957 = vmatprep.subr.mxu0 0.0
    %958 = vmatpush1.msra.mxu0 0.0
    %959 = vmatprep.subr.mxu0 0.0
    %960 = vmatpush1.msra.mxu0 0.0
    %961 = vmatprep.subr.mxu0 0.0
    %962 = vmatpush1.msra.mxu0 0.0
    %963 = vmatprep.subr.mxu0 0.0
    %964 = vmatpush1.msra.mxu0 0.0
    %965 = vmatprep.subr.mxu0 0.0
    %966 = vmatpush1.msra.mxu0 0.0
    %967 = vmatprep.subr.mxu0 0.0
    %968 = vmatpush1.msra.mxu0 0.0
    %969 = vmatprep.subr.mxu0 0.0
    %970 = vmatpush1.msra.mxu0 0.0
    %971 = vmatprep.subr.mxu0 0.0
    %972 = vmatpush1.msra.mxu0 0.0
    %973 = vmatprep.subr.mxu0 0.0
    %974 = vmatpush1.msra.mxu0 0.0
    %975 = vmatprep.subr.mxu0 0.0
    %976 = vmatpush1.msra.mxu0 0.0
    %977 = vmatprep.subr.mxu0 0.0
    %978 = vmatpush1.msra.mxu0 0.0
    %979 = vmatprep.subr.mxu0 0.0
    %980 = vmatpush1.msra.mxu0 0.0
    %981 = vmatprep.mubr.f32.mxu0 0.0
    %982 = vmatmul.mubr.f32.gmra.mrb[0].mxu0 %v822
    %v983 = vpop.f32.mrb[0].mxu0
    %v984 = vadd.f32 0.0, %v983
    %v985 = vpop.f32.mrb[0].mxu0
    %v986 = vadd.f32 0.0, %v985
    %987 = vmatprep.mubr.f32.mxu0 0.0
    %988 = vmatmul.mubr.f32.gmra.mrb[0].mxu0 %v825
    %v989 = vpop.f32.mrb[0].mxu0
    %v990 = vadd.f32 0.0, %v989
    %v991 = vpop.f32.mrb[0].mxu0
    %v992 = vadd.f32 0.0, %v991
    %993 = vmatprep.mubr.f32.mxu0 0.0
    %994 = vmatmul.mubr.f32.gmra.mrb[0].mxu0 %v828
    %v995 = vpop.f32.mrb[0].mxu0
    %v996 = vadd.f32 0.0, %v995
    %v997 = vpop.f32.mrb[0].mxu0
    %v998 = vadd.f32 0.0, %v997
    %999 = vmatprep.mubr.f32.mxu0 0.0
    %1000 = vmatmul.mubr.f32.gmra.mrb[0].mxu0 %v831
    %v1001 = vpop.f32.mrb[0].mxu0
    %v1002 = vadd.f32 0.0, %v1001
    %v1003 = vpop.f32.mrb[0].mxu0
    %v1004 = vadd.f32 0.0, %v1003
    %1005 = vmatprep.mubr.f32.mxu0 0.0
    %1006 = vmatmul.mubr.f32.gmra.mrb[0].mxu0 %v834
    %v1007 = vpop.f32.mrb[0].mxu0
    %v1008 = vadd.f32 0.0, %v1007
    %v1009 = vpop.f32.mrb[0].mxu0
    %v1010 = vadd.f32 0.0, %v1009
    %1011 = vmatprep.mubr.f32.mxu0 0.0
    %1012 = vmatmul.mubr.f32.gmra.mrb[0].mxu0 %v837
    %v1013 = vpop.f32.mrb[0].mxu0
    %v1014 = vadd.f32 0.0, %v1013
    %v1015 = vpop.f32.mrb[0].mxu0
    %v1016 = vadd.f32 0.0, %v1015
    %1017 = vmatprep.mubr.f32.mxu0 0.0
    %1018 = vmatmul.mubr.f32.gmra.mrb[0].mxu0 %v840
    %v1019 = vpop.f32.mrb[0].mxu0
    %v1020 = vadd.f32 0.0, %v1019
    %v1021 = vpop.f32.mrb[0].mxu0
    %v1022 = vadd.f32 0.0, %v1021
    %1023 = vmatprep.mubr.f32.mxu0 0.0
    %1024 = vmatmul.mubr.f32.gmra.mrb[0].mxu0 %v843
    %v1025 = vpop.f32.mrb[0].mxu0
    %v1026 = vadd.f32 0.0, %v1025
    %v1027 = vpop.f32.mrb[0].mxu0
    %v1028 = vadd.f32 0.0, %v1027
    %1029 = vmatprep.mubr.f32.mxu0 0.0
    %1030 = vmatmul.mubr.f32.gmra.mrb[0].mxu0 %v846
    %v1031 = vpop.f32.mrb[0].mxu0
    %v1032 = vadd.f32 0.0, %v1031
    %v1033 = vpop.f32.mrb[0].mxu0
    %v1034 = vadd.f32 0.0, %v1033
    %1035 = vmatprep.mubr.f32.mxu0 0.0
    %1036 = vmatmul.mubr.f32.gmra.mrb[0].mxu0 %v849
    %v1037 = vpop.f32.mrb[0].mxu0
    %v1038 = vadd.f32 0.0, %v1037
    %v1039 = vpop.f32.mrb[0].mxu0
    %v1040 = vadd.f32 0.0, %v1039
    %1041 = vmatprep.mubr.f32.mxu0 0.0
    %1042 = vmatmul.mubr.f32.gmra.mrb[0].mxu0 %v852
    %v1043 = vpop.f32.mrb[0].mxu0
    %v1044 = vadd.f32 0.0, %v1043
    %v1045 = vpop.f32.mrb[0].mxu0
    %v1046 = vadd.f32 0.0, %v1045
    %1047 = vmatprep.mubr.f32.mxu0 0.0
    %1048 = vmatmul.mubr.f32.gmra.mrb[0].mxu0 %v855
    %v1049 = vpop.f32.mrb[0].mxu0
    %v1050 = vadd.f32 0.0, %v1049
    %v1051 = vpop.f32.mrb[0].mxu0
    %v1052 = vadd.f32 0.0, %v1051
    %1053 = vmatprep.mubr.f32.mxu0 0.0
    %1054 = vmatmul.mubr.f32.gmra.mrb[0].mxu0 %v858
    %v1055 = vpop.f32.mrb[0].mxu0
    %v1056 = vadd.f32 0.0, %v1055
    %v1057 = vpop.f32.mrb[0].mxu0
    %v1058 = vadd.f32 0.0, %v1057
    %1059 = vmatprep.mubr.f32.mxu0 0.0
    %1060 = vmatmul.mubr.f32.gmra.mrb[0].mxu0 %v861
    %v1061 = vpop.f32.mrb[0].mxu0
    %v1062 = vadd.f32 0.0, %v1061
    %v1063 = vpop.f32.mrb[0].mxu0
    %v1064 = vadd.f32 0.0, %v1063
    %1065 = vmatprep.mubr.f32.mxu0 0.0
    %1066 = vmatmul.mubr.f32.gmra.mrb[0].mxu0 %v864
    %v1067 = vpop.f32.mrb[0].mxu0
    %v1068 = vadd.f32 0.0, %v1067
    %v1069 = vpop.f32.mrb[0].mxu0
    %v1070 = vadd.f32 0.0, %v1069
    %1071 = vmatprep.mubr.f32.mxu0 0.0
    %1072 = vmatmul.mubr.f32.gmra.mrb[0].mxu0 %v867
    %v1073 = vpop.f32.mrb[0].mxu0
    %v1074 = vadd.f32 0.0, %v1073
    %v1075 = vpop.f32.mrb[0].mxu0
    %v1076 = vadd.f32 0.0, %v1075
    %1077 = vmatprep.mubr.f32.mxu0 0.0
    %1078 = vmatmul.mubr.f32.gmra.mrb[0].mxu0 %v870
    %v1079 = vpop.f32.mrb[0].mxu0
    %v1080 = vadd.f32 0.0, %v1079
    %v1081 = vpop.f32.mrb[0].mxu0
    %v1082 = vadd.f32 0.0, %v1081
    %1083 = vmatprep.mubr.f32.mxu0 0.0
    %1084 = vmatmul.mubr.f32.gmra.mrb[0].mxu0 %v873
    %v1085 = vpop.f32.mrb[0].mxu0
    %v1086 = vadd.f32 0.0, %v1085
    %v1087 = vpop.f32.mrb[0].mxu0
    %v1088 = vadd.f32 0.0, %v1087
    %1089 = vmatprep.mubr.f32.mxu0 0.0
    %1090 = vmatmul.mubr.f32.gmra.mrb[0].mxu0 %v876
    %v1091 = vpop.f32.mrb[0].mxu0
    %v1092 = vadd.f32 0.0, %v1091
    %v1093 = vpop.f32.mrb[0].mxu0
    %v1094 = vadd.f32 0.0, %v1093
    %1095 = vmatprep.mubr.f32.mxu0 0.0
    %1096 = vmatmul.mubr.f32.gmra.mrb[0].mxu0 %v879
    %v1097 = vpop.f32.mrb[0].mxu0
    %v1098 = vadd.f32 0.0, %v1097
    %v1099 = vpop.f32.mrb[0].mxu0
    %v1100 = vadd.f32 0.0, %v1099
    %1101 = vmatprep.mubr.f32.mxu0 0.0
    %1102 = vmatmul.mubr.f32.gmra.mrb[0].mxu0 %v882
    %v1103 = vpop.f32.mrb[0].mxu0
    %v1104 = vadd.f32 0.0, %v1103
    %v1105 = vpop.f32.mrb[0].mxu0
    %v1106 = vadd.f32 0.0, %v1105
    %1107 = vmatprep.mubr.f32.mxu0 0.0
    %1108 = vmatmul.mubr.f32.gmra.mrb[0].mxu0 %v885
    %v1109 = vpop.f32.mrb[0].mxu0
    %v1110 = vadd.f32 0.0, %v1109
    %v1111 = vpop.f32.mrb[0].mxu0
    %v1112 = vadd.f32 0.0, %v1111
    %1113 = vmatprep.mubr.f32.mxu0 0.0
    %1114 = vmatmul.mubr.f32.gmra.mrb[0].mxu0 %v888
    %v1115 = vpop.f32.mrb[0].mxu0
    %v1116 = vadd.f32 0.0, %v1115
    %v1117 = vpop.f32.mrb[0].mxu0
    %v1118 = vadd.f32 0.0, %v1117
    %1119 = vmatprep.mubr.f32.mxu0 0.0
    %1120 = vmatmul.mubr.f32.gmra.mrb[0].mxu0 %v891
    %v1121 = vpop.f32.mrb[0].mxu0
    %v1122 = vadd.f32 0.0, %v1121
    %v1123 = vpop.f32.mrb[0].mxu0
    %v1124 = vadd.f32 0.0, %v1123
    %1125 = vmatprep.mubr.f32.mxu0 0.0
    %1126 = vmatmul.mubr.f32.gmra.mrb[0].mxu0 %v894
    %v1127 = vpop.f32.mrb[0].mxu0
    %v1128 = vadd.f32 0.0, %v1127
    %v1129 = vpop.f32.mrb[0].mxu0
    %v1130 = vadd.f32 0.0, %v1129
    %1131 = vmatprep.mubr.f32.mxu0 0.0
    %1132 = vmatmul.mubr.f32.gmra.mrb[0].mxu0 %v897
    %v1133 = vpop.f32.mrb[0].mxu0
    %v1134 = vadd.f32 0.0, %v1133
    %v1135 = vpop.f32.mrb[0].mxu0
    %v1136 = vadd.f32 0.0, %v1135
    %1137 = vmatprep.mubr.f32.mxu0 0.0
    %1138 = vmatmul.mubr.f32.gmra.mrb[0].mxu0 %v900
    %v1139 = vpop.f32.mrb[0].mxu0
    %v1140 = vadd.f32 0.0, %v1139
    %v1141 = vpop.f32.mrb[0].mxu0
    %v1142 = vadd.f32 0.0, %v1141
    %1143 = vmatprep.mubr.f32.mxu0 0.0
    %1144 = vmatmul.mubr.f32.gmra.mrb[0].mxu0 %v903
    %v1145 = vpop.f32.mrb[0].mxu0
    %v1146 = vadd.f32 0.0, %v1145
    %v1147 = vpop.f32.mrb[0].mxu0
    %v1148 = vadd.f32 0.0, %v1147
    %1149 = vmatprep.mubr.f32.mxu0 0.0
    %1150 = vmatmul.mubr.f32.gmra.mrb[0].mxu0 %v906
    %v1151 = vpop.f32.mrb[0].mxu0
    %v1152 = vadd.f32 0.0, %v1151
    %v1153 = vpop.f32.mrb[0].mxu0
    %v1154 = vadd.f32 0.0, %v1153
    %1155 = vmatprep.mubr.f32.mxu0 0.0
    %1156 = vmatmul.mubr.f32.gmra.mrb[0].mxu0 %v909
    %v1157 = vpop.f32.mrb[0].mxu0
    %v1158 = vadd.f32 0.0, %v1157
    %v1159 = vpop.f32.mrb[0].mxu0
    %v1160 = vadd.f32 0.0, %v1159
    %1161 = vmatprep.mubr.f32.mxu0 0.0
    %1162 = vmatmul.mubr.f32.gmra.mrb[0].mxu0 %v912
    %v1163 = vpop.f32.mrb[0].mxu0
    %v1164 = vadd.f32 0.0, %v1163
    %v1165 = vpop.f32.mrb[0].mxu0
    %v1166 = vadd.f32 0.0, %v1165
    %1167 = vmatprep.mubr.f32.mxu0 0.0
    %1168 = vmatmul.mubr.f32.gmra.mrb[0].mxu0 %v915
    %v1169 = vpop.f32.mrb[0].mxu0
    %v1170 = vadd.f32 0.0, %v1169
    %v1171 = vpop.f32.mrb[0].mxu0
    %v1172 = vadd.f32 0.0, %v1171
    %1173 = vdwg.mxu0
    %v1174 = vmul.f32 %v984, %v109
    %v1175 = vmul.f32 %v986, %v110
    %v1176 = vmul.f32 %v990, %v111
    %v1177 = vmul.f32 %v992, %v112
    %v1178 = vmul.f32 %v996, %v113
    %v1179 = vmul.f32 %v998, %v114
    %v1180 = vmul.f32 %v1002, %v115
    %v1181 = vmul.f32 %v1004, %v116
    %v1182 = vmul.f32 %v1008, %v117
    %v1183 = vmul.f32 %v1010, %v118
    %v1184 = vmul.f32 %v1014, %v119
    %v1185 = vmul.f32 %v1016, %v120
    %v1186 = vmul.f32 %v1020, %v121
    %v1187 = vmul.f32 %v1022, %v122
    %v1188 = vmul.f32 %v1026, %v123
    %v1189 = vmul.f32 %v1028, %v124
    %v1190 = vmul.f32 %v1032, %v125
    %v1191 = vmul.f32 %v1034, %v126
    %v1192 = vmul.f32 %v1038, %v127
    %v1193 = vmul.f32 %v1040, %v128
    %v1194 = vmul.f32 %v1044, %v129
    %v1195 = vmul.f32 %v1046, %v130
    %v1196 = vmul.f32 %v1050, %v131
    %v1197 = vmul.f32 %v1052, %v132
    %v1198 = vmul.f32 %v1056, %v133
    %v1199 = vmul.f32 %v1058, %v134
    %v1200 = vmul.f32 %v1062, %v135
    %v1201 = vmul.f32 %v1064, %v136
    %v1202 = vmul.f32 %v1068, %v137
    %v1203 = vmul.f32 %v1070, %v138
    %v1204 = vmul.f32 %v1074, %v139
    %v1205 = vmul.f32 %v1076, %v140
    %v1206 = vmul.f32 %v1080, %v141
    %v1207 = vmul.f32 %v1082, %v142
    %v1208 = vmul.f32 %v1086, %v143
    %v1209 = vmul.f32 %v1088, %v144
    %v1210 = vmul.f32 %v1092, %v145
    %v1211 = vmul.f32 %v1094, %v146
    %v1212 = vmul.f32 %v1098, %v147
    %v1213 = vmul.f32 %v1100, %v148
    %v1214 = vmul.f32 %v1104, %v149
    %v1215 = vmul.f32 %v1106, %v150
    %v1216 = vmul.f32 %v1110, %v151
    %v1217 = vmul.f32 %v1112, %v152
    %v1218 = vmul.f32 %v1116, %v153
    %v1219 = vmul.f32 %v1118, %v154
    %v1220 = vmul.f32 %v1122, %v155
    %v1221 = vmul.f32 %v1124, %v156
    %v1222 = vmul.f32 %v1128, %v157
    %v1223 = vmul.f32 %v1130, %v158
    %v1224 = vmul.f32 %v1134, %v159
    %v1225 = vmul.f32 %v1136, %v160
    %v1226 = vmul.f32 %v1140, %v161
    %v1227 = vmul.f32 %v1142, %v162
    %v1228 = vmul.f32 %v1146, %v163
    %v1229 = vmul.f32 %v1148, %v164
    %v1230 = vmul.f32 %v1152, %v165
    %v1231 = vmul.f32 %v1154, %v166
    %v1232 = vmul.f32 %v1158, %v167
    %v1233 = vmul.f32 %v1160, %v168
    %v1234 = vmul.f32 %v1164, %v169
    %v1235 = vmul.f32 %v1166, %v170
    %v1236 = vmul.f32 %v1170, %v171
    %v1237 = vmul.f32 %v1172, %v172
    %v1238 = vmul.f32 %v698, 16.0
    %v1239 = vmul.f32 %v700, 16.0
    %v1240 = vmul.f32 %v704, 16.0
    %v1241 = vmul.f32 %v706, 16.0
    %1242 = vmatprep.subr.mxu0 %v1175
    %1243 = vmatpush1.msra.mxu0 %v1174
    %1244 = vmatprep.subr.mxu0 %v1177
    %1245 = vmatpush1.msra.mxu0 %v1176
    %1246 = vmatprep.subr.mxu0 %v1179
    %1247 = vmatpush1.msra.mxu0 %v1178
    %1248 = vmatprep.subr.mxu0 %v1181
    %1249 = vmatpush1.msra.mxu0 %v1180
    %1250 = vmatprep.subr.mxu0 %v1183
    %1251 = vmatpush1.msra.mxu0 %v1182
    %1252 = vmatprep.subr.mxu0 %v1185
    %1253 = vmatpush1.msra.mxu0 %v1184
    %1254 = vmatprep.subr.mxu0 %v1187
    %1255 = vmatpush1.msra.mxu0 %v1186
    %1256 = vmatprep.subr.mxu0 %v1189
    %1257 = vmatpush1.msra.mxu0 %v1188
    %1258 = vmatprep.subr.mxu0 %v1191
    %1259 = vmatpush1.msra.mxu0 %v1190
    %1260 = vmatprep.subr.mxu0 %v1193
    %1261 = vmatpush1.msra.mxu0 %v1192
    %1262 = vmatprep.subr.mxu0 %v1195
    %1263 = vmatpush1.msra.mxu0 %v1194
    %1264 = vmatprep.subr.mxu0 %v1197
    %1265 = vmatpush1.msra.mxu0 %v1196
    %1266 = vmatprep.subr.mxu0 %v1199
    %1267 = vmatpush1.msra.mxu0 %v1198
    %1268 = vmatprep.subr.mxu0 %v1201
    %1269 = vmatpush1.msra.mxu0 %v1200
    %1270 = vmatprep.subr.mxu0 %v1203
    %1271 = vmatpush1.msra.mxu0 %v1202
    %1272 = vmatprep.subr.mxu0 %v1205
    %1273 = vmatpush1.msra.mxu0 %v1204
    %1274 = vmatprep.subr.mxu0 %v1207
    %1275 = vmatpush1.msra.mxu0 %v1206
    %1276 = vmatprep.subr.mxu0 %v1209
    %1277 = vmatpush1.msra.mxu0 %v1208
    %1278 = vmatprep.subr.mxu0 %v1211
    %1279 = vmatpush1.msra.mxu0 %v1210
    %1280 = vmatprep.subr.mxu0 %v1213
    %1281 = vmatpush1.msra.mxu0 %v1212
    %1282 = vmatprep.subr.mxu0 %v1215
    %1283 = vmatpush1.msra.mxu0 %v1214
    %1284 = vmatprep.subr.mxu0 %v1217
    %1285 = vmatpush1.msra.mxu0 %v1216
    %1286 = vmatprep.subr.mxu0 %v1219
    %1287 = vmatpush1.msra.mxu0 %v1218
    %1288 = vmatprep.subr.mxu0 %v1221
    %1289 = vmatpush1.msra.mxu0 %v1220
    %1290 = vmatprep.subr.mxu0 %v1223
    %1291 = vmatpush1.msra.mxu0 %v1222
    %1292 = vmatprep.subr.mxu0 %v1225
    %1293 = vmatpush1.msra.mxu0 %v1224
    %1294 = vmatprep.subr.mxu0 %v1227
    %1295 = vmatpush1.msra.mxu0 %v1226
    %1296 = vmatprep.subr.mxu0 %v1229
    %1297 = vmatpush1.msra.mxu0 %v1228
    %1298 = vmatprep.subr.mxu0 %v1231
    %1299 = vmatpush1.msra.mxu0 %v1230
    %1300 = vmatprep.subr.mxu0 %v1233
    %1301 = vmatpush1.msra.mxu0 %v1232
    %1302 = vmatprep.subr.mxu0 %v1235
    %1303 = vmatpush1.msra.mxu0 %v1234
    %1304 = vmatprep.subr.mxu0 %v1237
    %1305 = vmatpush1.msra.mxu0 %v1236
    %1306 = vmatprep.mubr.f32.mxu0 %v729
    %1307 = vmatmul.mubr.f32.gmra.mrb[0].mxu0 %v728
    %v1308 = vpop.f32.mrb[0].mxu0
    %v1309 = vadd.f32 %v1238, %v1308
    %v1310 = vpop.f32.mrb[0].mxu0
    %v1311 = vadd.f32 %v1239, %v1310
    %1312 = vmatprep.mubr.f32.mxu0 %v731
    %1313 = vmatmul.mubr.f32.gmra.mrb[0].mxu0 %v730
    %v1314 = vpop.f32.mrb[0].mxu0
    %v1315 = vadd.f32 %v1240, %v1314
    %v1316 = vpop.f32.mrb[0].mxu0
    %v1317 = vadd.f32 %v1241, %v1316
    %1318 = vdwg.mxu0
    %v1319 = vadd.f32 %v752, %v754
    %v1320 = vrot.slane %v1319, 4
    %v1321 = vadd.f32 %v1319, %v1320
    %v1322 = vrot.slane %v1321, 2
    %v1323 = vadd.f32 %v1321, %v1322
    %v1324 = vrot.slane %v1323, 1
    %v1325 = vadd.f32 %v1323, %v1324
    %v1326 = vadd.f32 %v753, %v755
    %v1327 = vrot.slane %v1326, 4
    %v1328 = vadd.f32 %v1326, %v1327
    %v1329 = vrot.slane %v1328, 2
    %v1330 = vadd.f32 %v1328, %v1329
    %v1331 = vrot.slane %v1330, 1
    %v1332 = vadd.f32 %v1330, %v1331
    %v1333 = vmul.f32 %v728, %v1325
    %v1334 = vmul.f32 %v729, %v1332
    %v1335 = vmul.f32 %v730, %v1325
    %v1336 = vmul.f32 %v731, %v1332
    %1337 = vmatprep.subr.mxu0 %v110
    %1338 = vmatpush1.msra.mxu0 %v109
    %1339 = vmatprep.subr.mxu0 %v112
    %1340 = vmatpush1.msra.mxu0 %v111
    %1341 = vmatprep.subr.mxu0 %v114
    %1342 = vmatpush1.msra.mxu0 %v113
    %1343 = vmatprep.subr.mxu0 %v116
    %1344 = vmatpush1.msra.mxu0 %v115
    %1345 = vmatprep.subr.mxu0 %v118
    %1346 = vmatpush1.msra.mxu0 %v117
    %1347 = vmatprep.subr.mxu0 %v120
    %1348 = vmatpush1.msra.mxu0 %v119
    %1349 = vmatprep.subr.mxu0 %v122
    %1350 = vmatpush1.msra.mxu0 %v121
    %1351 = vmatprep.subr.mxu0 %v124
    %1352 = vmatpush1.msra.mxu0 %v123
    %1353 = vmatprep.subr.mxu0 %v126
    %1354 = vmatpush1.msra.mxu0 %v125
    %1355 = vmatprep.subr.mxu0 %v128
    %1356 = vmatpush1.msra.mxu0 %v127
    %1357 = vmatprep.subr.mxu0 %v130
    %1358 = vmatpush1.msra.mxu0 %v129
    %1359 = vmatprep.subr.mxu0 %v132
    %1360 = vmatpush1.msra.mxu0 %v131
    %1361 = vmatprep.subr.mxu0 %v134
    %1362 = vmatpush1.msra.mxu0 %v133
    %1363 = vmatprep.subr.mxu0 %v136
    %1364 = vmatpush1.msra.mxu0 %v135
    %1365 = vmatprep.subr.mxu0 %v138
    %1366 = vmatpush1.msra.mxu0 %v137
    %1367 = vmatprep.subr.mxu0 %v140
    %1368 = vmatpush1.msra.mxu0 %v139
    %1369 = vmatprep.subr.mxu0 %v142
    %1370 = vmatpush1.msra.mxu0 %v141
    %1371 = vmatprep.subr.mxu0 %v144
    %1372 = vmatpush1.msra.mxu0 %v143
    %1373 = vmatprep.subr.mxu0 %v146
    %1374 = vmatpush1.msra.mxu0 %v145
    %1375 = vmatprep.subr.mxu0 %v148
    %1376 = vmatpush1.msra.mxu0 %v147
    %1377 = vmatprep.subr.mxu0 %v150
    %1378 = vmatpush1.msra.mxu0 %v149
    %1379 = vmatprep.subr.mxu0 %v152
    %1380 = vmatpush1.msra.mxu0 %v151
    %1381 = vmatprep.subr.mxu0 %v154
    %1382 = vmatpush1.msra.mxu0 %v153
    %1383 = vmatprep.subr.mxu0 %v156
    %1384 = vmatpush1.msra.mxu0 %v155
    %1385 = vmatprep.subr.mxu0 %v158
    %1386 = vmatpush1.msra.mxu0 %v157
    %1387 = vmatprep.subr.mxu0 %v160
    %1388 = vmatpush1.msra.mxu0 %v159
    %1389 = vmatprep.subr.mxu0 %v162
    %1390 = vmatpush1.msra.mxu0 %v161
    %1391 = vmatprep.subr.mxu0 %v164
    %1392 = vmatpush1.msra.mxu0 %v163
    %1393 = vmatprep.subr.mxu0 %v166
    %1394 = vmatpush1.msra.mxu0 %v165
    %1395 = vmatprep.subr.mxu0 %v168
    %1396 = vmatpush1.msra.mxu0 %v167
    %1397 = vmatprep.subr.mxu0 %v170
    %1398 = vmatpush1.msra.mxu0 %v169
    %1399 = vmatprep.subr.mxu0 %v172
    %1400 = vmatpush1.msra.mxu0 %v171
    %1401 = vmatprep.mubr.f32.mxu0 %v1334
    %1402 = vmatmul.mubr.f32.gmra.mrb[0].mxu0 %v1333
    %v1403 = vpop.f32.mrb[0].mxu0
    %v1404 = vadd.f32 16.0, %v1403
    %v1405 = vpop.f32.mrb[0].mxu0
    %v1406 = vadd.f32 16.0, %v1405
    %1407 = vmatprep.mubr.f32.mxu0 %v1336
    %1408 = vmatmul.mubr.f32.gmra.mrb[0].mxu0 %v1335
    %v1409 = vpop.f32.mrb[0].mxu0
    %v1410 = vadd.f32 16.0, %v1409
    %v1411 = vpop.f32.mrb[0].mxu0
    %v1412 = vadd.f32 16.0, %v1411
    %1413 = vdwg.mxu0
    %v1414 = vrcp.pop %v1404
    %v1415 = vrcp.pop %v1406
    %v1416 = vrcp.pop %v1410
    %v1417 = vrcp.pop %v1412
    %v1418 = vmul.f32 %v1309, %v1414
    %v1419 = vmul.f32 %v1311, %v1415
    %v1420 = vmul.f32 %v1315, %v1416
    %v1421 = vmul.f32 %v1317, %v1417
    %v1422 = vmul.f32 %v347, 0.5
    %v1423 = vmul.f32 %v348, 0.5
    %1424 = vmatprep.subr.mxu0 0.0
    %1425 = vmatpush1.msra.mxu0 %v173
    %1426 = vmatprep.subr.mxu0 0.0
    %1427 = vmatpush1.msra.mxu0 %v174
    %1428 = vmatprep.subr.mxu0 0.0
    %1429 = vmatpush1.msra.mxu0 %v175
    %1430 = vmatprep.subr.mxu0 0.0
    %1431 = vmatpush1.msra.mxu0 %v176
    %1432 = vmatprep.subr.mxu0 0.0
    %1433 = vmatpush1.msra.mxu0 %v177
    %1434 = vmatprep.subr.mxu0 0.0
    %1435 = vmatpush1.msra.mxu0 %v178
    %1436 = vmatprep.subr.mxu0 0.0
    %1437 = vmatpush1.msra.mxu0 %v179
    %1438 = vmatprep.subr.mxu0 0.0
    %1439 = vmatpush1.msra.mxu0 %v180
    %1440 = vmatprep.subr.mxu0 0.0
    %1441 = vmatpush1.msra.mxu0 %v181
    %1442 = vmatprep.subr.mxu0 0.0
    %1443 = vmatpush1.msra.mxu0 %v182
    %1444 = vmatprep.subr.mxu0 0.0
    %1445 = vmatpush1.msra.mxu0 %v183
    %1446 = vmatprep.subr.mxu0 0.0
    %1447 = vmatpush1.msra.mxu0 %v184
    %1448 = vmatprep.subr.mxu0 0.0
    %1449 = vmatpush1.msra.mxu0 %v185
    %1450 = vmatprep.subr.mxu0 0.0
    %1451 = vmatpush1.msra.mxu0 %v186
    %1452 = vmatprep.subr.mxu0 0.0
    %1453 = vmatpush1.msra.mxu0 %v187
    %1454 = vmatprep.subr.mxu0 0.0
    %1455 = vmatpush1.msra.mxu0 %v188
    %1456 = vmatprep.subr.mxu0 0.0
    %1457 = vmatpush1.msra.mxu0 %v189
    %1458 = vmatprep.subr.mxu0 0.0
    %1459 = vmatpush1.msra.mxu0 %v190
    %1460 = vmatprep.subr.mxu0 0.0
    %1461 = vmatpush1.msra.mxu0 %v191
    %1462 = vmatprep.subr.mxu0 0.0
    %1463 = vmatpush1.msra.mxu0 %v192
    %1464 = vmatprep.subr.mxu0 0.0
    %1465 = vmatpush1.msra.mxu0 %v193
    %1466 = vmatprep.subr.mxu0 0.0
    %1467 = vmatpush1.msra.mxu0 %v194
    %1468 = vmatprep.subr.mxu0 0.0
    %1469 = vmatpush1.msra.mxu0 %v195
    %1470 = vmatprep.subr.mxu0 0.0
    %1471 = vmatpush1.msra.mxu0 %v196
    %1472 = vmatprep.subr.mxu0 0.0
    %1473 = vmatpush1.msra.mxu0 %v197
    %1474 = vmatprep.subr.mxu0 0.0
    %1475 = vmatpush1.msra.mxu0 %v198
    %1476 = vmatprep.subr.mxu0 0.0
    %1477 = vmatpush1.msra.mxu0 %v199
    %1478 = vmatprep.subr.mxu0 0.0
    %1479 = vmatpush1.msra.mxu0 %v200
    %1480 = vmatprep.subr.mxu0 0.0
    %1481 = vmatpush1.msra.mxu0 %v201
    %1482 = vmatprep.subr.mxu0 0.0
    %1483 = vmatpush1.msra.mxu0 %v202
    %1484 = vmatprep.subr.mxu0 0.0
    %1485 = vmatpush1.msra.mxu0 %v203
    %1486 = vmatprep.subr.mxu0 0.0
    %1487 = vmatpush1.msra.mxu0 %v204
    %1488 = vmatprep.mubr.f32.mxu0 %v1419
    %1489 = vmatmul.mubr.f32.gmra.mrb[0].mxu0 %v1418
    %v1490 = vpop.f32.mrb[0].mxu0
    %v1491 = vadd.f32 %v1422, %v1490
    %v1492 = vpop.f32.mrb[0].mxu0
    %1493 = vmatprep.mubr.f32.mxu0 %v1421
    %1494 = vmatmul.mubr.f32.gmra.mrb[0].mxu0 %v1420
    %v1495 = vpop.f32.mrb[0].mxu0
    %v1496 = vadd.f32 %v1423, %v1495
    %v1497 = vpop.f32.mrb[0].mxu0
    %1498 = vdwg.mxu0
    %v1499 = vld [vmem:[%s7] sm:$0x1]
    %v1500 = vld [vmem:[%s8] sm:$0x1]
    %1501 = vadd.xlane.f32.xlu0 %v1491
    %v1502 = vpop.xlane.xlu0 %1501
    %1503 = vadd.xlane.f32.xlu0 %v1496
    %v1504 = vpop.xlane.xlu0 %1503
    %v1505 = vmul.f32 %v1502, 0.03125
    %v1506 = vmul.f32 %v1504, 0.03125
    %v1507 = vmul.f32 %v1491, %v1491
    %v1508 = vmul.f32 %v1496, %v1496
    %1509 = vadd.xlane.f32.xlu0 %v1507
    %v1510 = vpop.xlane.xlu0 %1509
    %1511 = vadd.xlane.f32.xlu0 %v1508
    %v1512 = vpop.xlane.xlu0 %1511
    %v1513 = vmul.f32 %v1510, 0.03125
    %v1514 = vmul.f32 %v1512, 0.03125
    %v1515 = vmul.f32 %v1505, %v1505
    %v1516 = vmul.f32 %v1506, %v1506
    %v1517 = vsub.f32 %v1513, %v1515
    %v1518 = vsub.f32 %v1514, %v1516
    %v1519 = vsub.f32 %v1491, %v1505
    %v1520 = vsub.f32 %v1496, %v1506
    %v1521 = vadd.f32 %v1517, 1e-05
    %v1522 = vadd.f32 %v1518, 1e-05
    %v1523 = vrsqrt.pop %v1521
    %v1524 = vrsqrt.pop %v1522
    %v1525 = vmul.f32 %v1519, %v1523
    %v1526 = vmul.f32 %v1520, %v1524
    %v1528 = vlaneseq
    %v1529 = vshrl.u32 %v1528, 7
    %v1530 = vsub.s32 0, %v1529
    %v1531 = vrot.slane %v1499, %v1530
    %v1533 = vmul.f32 %v1525, %v1531
    %v1534 = vmul.f32 %v1526, %v1531
    %v1536 = vlaneseq
    %v1537 = vshrl.u32 %v1536, 7
    %v1538 = vsub.s32 0, %v1537
    %v1539 = vrot.slane %v1500, %v1538
    %v1541 = vadd.f32 %v1533, %v1539
    %v1542 = vadd.f32 %v1534, %v1539
    %s1543 = scalar_lea.vmem [#allocation7], 768
    %v1544 = vld [vmem:[%s1543] sm:$0xff]
    %v1545 = vld [vmem:[%s1543 + $0x8] sm:$0xff]
    %v1546 = vld [vmem:[%s1543 + $0x10] sm:$0xff]
    %v1547 = vld [vmem:[%s1543 + $0x18] sm:$0xff]
    %v1548 = vld [vmem:[%s1543 + $0x20] sm:$0xff]
    %v1549 = vld [vmem:[%s1543 + $0x28] sm:$0xff]
    %v1550 = vld [vmem:[%s1543 + $0x30] sm:$0xff]
    %v1551 = vld [vmem:[%s1543 + $0x38] sm:$0xff]
    %v1552 = vld [vmem:[%s1543 + $0x40] sm:$0xff]
    %v1553 = vld [vmem:[%s1543 + $0x48] sm:$0xff]
    %v1554 = vld [vmem:[%s1543 + $0x50] sm:$0xff]
    %v1555 = vld [vmem:[%s1543 + $0x58] sm:$0xff]
    %v1556 = vld [vmem:[%s1543 + $0x60] sm:$0xff]
    %v1557 = vld [vmem:[%s1543 + $0x68] sm:$0xff]
    %v1558 = vld [vmem:[%s1543 + $0x70] sm:$0xff]
    %v1559 = vld [vmem:[%s1543 + $0x78] sm:$0xff]
    %v1560 = vld [vmem:[%s1543 + $0x80] sm:$0xff]
    %v1561 = vld [vmem:[%s1543 + $0x88] sm:$0xff]
    %v1562 = vld [vmem:[%s1543 + $0x90] sm:$0xff]
    %v1563 = vld [vmem:[%s1543 + $0x98] sm:$0xff]
    %v1564 = vld [vmem:[%s1543 + $0xa0] sm:$0xff]
    %v1565 = vld [vmem:[%s1543 + $0xa8] sm:$0xff]
    %v1566 = vld [vmem:[%s1543 + $0xb0] sm:$0xff]
    %v1567 = vld [vmem:[%s1543 + $0xb8] sm:$0xff]
    %v1568 = vld [vmem:[%s1543 + $0xc0] sm:$0xff]
    %v1569 = vld [vmem:[%s1543 + $0xc8] sm:$0xff]
    %v1570 = vld [vmem:[%s1543 + $0xd0] sm:$0xff]
    %v1571 = vld [vmem:[%s1543 + $0xd8] sm:$0xff]
    %v1572 = vld [vmem:[%s1543 + $0xe0] sm:$0xff]
    %v1573 = vld [vmem:[%s1543 + $0xe8] sm:$0xff]
    %v1574 = vld [vmem:[%s1543 + $0xf0] sm:$0xff]
    %v1575 = vld [vmem:[%s1543 + $0xf8] sm:$0xff]
    %v1576 = vld [vmem:[%s1543 + $0x100] sm:$0xff]
    %v1577 = vld [vmem:[%s1543 + $0x108] sm:$0xff]
    %v1578 = vld [vmem:[%s1543 + $0x110] sm:$0xff]
    %v1579 = vld [vmem:[%s1543 + $0x118] sm:$0xff]
    %v1580 = vld [vmem:[%s1543 + $0x120] sm:$0xff]
    %v1581 = vld [vmem:[%s1543 + $0x128] sm:$0xff]
    %v1582 = vld [vmem:[%s1543 + $0x130] sm:$0xff]
    %v1583 = vld [vmem:[%s1543 + $0x138] sm:$0xff]
    %v1584 = vld [vmem:[%s1543 + $0x140] sm:$0xff]
    %v1585 = vld [vmem:[%s1543 + $0x148] sm:$0xff]
    %v1586 = vld [vmem:[%s1543 + $0x150] sm:$0xff]
    %v1587 = vld [vmem:[%s1543 + $0x158] sm:$0xff]
    %v1588 = vld [vmem:[%s1543 + $0x160] sm:$0xff]
    %v1589 = vld [vmem:[%s1543 + $0x168] sm:$0xff]
    %v1590 = vld [vmem:[%s1543 + $0x170] sm:$0xff]
    %v1591 = vld [vmem:[%s1543 + $0x178] sm:$0xff]
    %v1592 = vld [vmem:[%s1543 + $0x180] sm:$0xff]
    %v1593 = vld [vmem:[%s1543 + $0x188] sm:$0xff]
    %v1594 = vld [vmem:[%s1543 + $0x190] sm:$0xff]
    %v1595 = vld [vmem:[%s1543 + $0x198] sm:$0xff]
    %v1596 = vld [vmem:[%s1543 + $0x1a0] sm:$0xff]
    %v1597 = vld [vmem:[%s1543 + $0x1a8] sm:$0xff]
    %v1598 = vld [vmem:[%s1543 + $0x1b0] sm:$0xff]
    %v1599 = vld [vmem:[%s1543 + $0x1b8] sm:$0xff]
    %v1600 = vld [vmem:[%s1543 + $0x1c0] sm:$0xff]
    %v1601 = vld [vmem:[%s1543 + $0x1c8] sm:$0xff]
    %v1602 = vld [vmem:[%s1543 + $0x1d0] sm:$0xff]
    %v1603 = vld [vmem:[%s1543 + $0x1d8] sm:$0xff]
    %v1604 = vld [vmem:[%s1543 + $0x1e0] sm:$0xff]
    %v1605 = vld [vmem:[%s1543 + $0x1e8] sm:$0xff]
    %v1606 = vld [vmem:[%s1543 + $0x1f0] sm:$0xff]
    %v1607 = vld [vmem:[%s1543 + $0x1f8] sm:$0xff]
    %v1608 = vld [vmem:[%s1543 + $0x200] sm:$0xff]
    %v1609 = vld [vmem:[%s1543 + $0x208] sm:$0xff]
    %v1610 = vld [vmem:[%s1543 + $0x210] sm:$0xff]
    %v1611 = vld [vmem:[%s1543 + $0x218] sm:$0xff]
    %v1612 = vld [vmem:[%s1543 + $0x220] sm:$0xff]
    %v1613 = vld [vmem:[%s1543 + $0x228] sm:$0xff]
    %v1614 = vld [vmem:[%s1543 + $0x230] sm:$0xff]
    %v1615 = vld [vmem:[%s1543 + $0x238] sm:$0xff]
    %v1616 = vld [vmem:[%s1543 + $0x240] sm:$0xff]
    %v1617 = vld [vmem:[%s1543 + $0x248] sm:$0xff]
    %v1618 = vld [vmem:[%s1543 + $0x250] sm:$0xff]
    %v1619 = vld [vmem:[%s1543 + $0x258] sm:$0xff]
    %v1620 = vld [vmem:[%s1543 + $0x260] sm:$0xff]
    %v1621 = vld [vmem:[%s1543 + $0x268] sm:$0xff]
    %v1622 = vld [vmem:[%s1543 + $0x270] sm:$0xff]
    %v1623 = vld [vmem:[%s1543 + $0x278] sm:$0xff]
    %v1624 = vld [vmem:[%s1543 + $0x280] sm:$0xff]
    %v1625 = vld [vmem:[%s1543 + $0x288] sm:$0xff]
    %v1626 = vld [vmem:[%s1543 + $0x290] sm:$0xff]
    %v1627 = vld [vmem:[%s1543 + $0x298] sm:$0xff]
    %v1628 = vld [vmem:[%s1543 + $0x2a0] sm:$0xff]
    %v1629 = vld [vmem:[%s1543 + $0x2a8] sm:$0xff]
    %v1630 = vld [vmem:[%s1543 + $0x2b0] sm:$0xff]
    %v1631 = vld [vmem:[%s1543 + $0x2b8] sm:$0xff]
    %v1632 = vld [vmem:[%s1543 + $0x2c0] sm:$0xff]
    %v1633 = vld [vmem:[%s1543 + $0x2c8] sm:$0xff]
    %v1634 = vld [vmem:[%s1543 + $0x2d0] sm:$0xff]
    %v1635 = vld [vmem:[%s1543 + $0x2d8] sm:$0xff]
    %v1636 = vld [vmem:[%s1543 + $0x2e0] sm:$0xff]
    %v1637 = vld [vmem:[%s1543 + $0x2e8] sm:$0xff]
    %v1638 = vld [vmem:[%s1543 + $0x2f0] sm:$0xff]
    %v1639 = vld [vmem:[%s1543 + $0x2f8] sm:$0xff]
    %s1640 = scalar_lea.vmem %s6, 6
    %v1641 = vld [vmem:[%s1640] sm:$0x3f]
    %v1643 = vlaneseq
    %v1644 = vshrl.u32 %v1643, 7
    %v1645 = vsub.s32 0, %v1644
    %v1646 = vrot.slane %v1641, %v1645
    %v1647 = vlaneseq
    %v1648 = vshrl.u32 %v1647, 7
    %v1649 = vsub.s32 1, %v1648
    %v1650 = vrot.slane %v1641, %v1649
    %v1651 = vlaneseq
    %v1652 = vshrl.u32 %v1651, 7
    %v1653 = vsub.s32 2, %v1652
    %v1654 = vrot.slane %v1641, %v1653
    %v1655 = vlaneseq
    %v1656 = vshrl.u32 %v1655, 7
    %v1657 = vsub.s32 3, %v1656
    %v1658 = vrot.slane %v1641, %v1657
    %v1659 = vlaneseq
    %v1660 = vshrl.u32 %v1659, 7
    %v1661 = vsub.s32 4, %v1660
    %v1662 = vrot.slane %v1641, %v1661
    %v1663 = vlaneseq
    %v1664 = vshrl.u32 %v1663, 7
    %v1665 = vsub.s32 5, %v1664
    %v1666 = vrot.slane %v1641, %v1665
    %1673 = vmatprep.subr.mxu0 %v1545
    %1674 = vmatpush1.msra.mxu0 %v1544
    %1675 = vmatprep.subr.mxu0 %v1551
    %1676 = vmatpush1.msra.mxu0 %v1550
    %1677 = vmatprep.subr.mxu0 %v1557
    %1678 = vmatpush1.msra.mxu0 %v1556
    %1679 = vmatprep.subr.mxu0 %v1563
    %1680 = vmatpush1.msra.mxu0 %v1562
    %1681 = vmatprep.subr.mxu0 %v1569
    %1682 = vmatpush1.msra.mxu0 %v1568
    %1683 = vmatprep.subr.mxu0 %v1575
    %1684 = vmatpush1.msra.mxu0 %v1574
    %1685 = vmatprep.subr.mxu0 %v1581
    %1686 = vmatpush1.msra.mxu0 %v1580
    %1687 = vmatprep.subr.mxu0 %v1587
    %1688 = vmatpush1.msra.mxu0 %v1586
    %1689 = vmatprep.subr.mxu0 %v1593
    %1690 = vmatpush1.msra.mxu0 %v1592
    %1691 = vmatprep.subr.mxu0 %v1599
    %1692 = vmatpush1.msra.mxu0 %v1598
    %1693 = vmatprep.subr.mxu0 %v1605
    %1694 = vmatpush1.msra.mxu0 %v1604
    %1695 = vmatprep.subr.mxu0 %v1611
    %1696 = vmatpush1.msra.mxu0 %v1610
    %1697 = vmatprep.subr.mxu0 %v1617
    %1698 = vmatpush1.msra.mxu0 %v1616
    %1699 = vmatprep.subr.mxu0 %v1623
    %1700 = vmatpush1.msra.mxu0 %v1622
    %1701 = vmatprep.subr.mxu0 %v1629
    %1702 = vmatpush1.msra.mxu0 %v1628
    %1703 = vmatprep.subr.mxu0 %v1635
    %1704 = vmatpush1.msra.mxu0 %v1634
    %1705 = vmatprep.subr.mxu0 0.0
    %1706 = vmatpush1.msra.mxu0 0.0
    %1707 = vmatprep.subr.mxu0 0.0
    %1708 = vmatpush1.msra.mxu0 0.0
    %1709 = vmatprep.subr.mxu0 0.0
    %1710 = vmatpush1.msra.mxu0 0.0
    %1711 = vmatprep.subr.mxu0 0.0
    %1712 = vmatpush1.msra.mxu0 0.0
    %1713 = vmatprep.subr.mxu0 0.0
    %1714 = vmatpush1.msra.mxu0 0.0
    %1715 = vmatprep.subr.mxu0 0.0
    %1716 = vmatpush1.msra.mxu0 0.0
    %1717 = vmatprep.subr.mxu0 0.0
    %1718 = vmatpush1.msra.mxu0 0.0
    %1719 = vmatprep.subr.mxu0 0.0
    %1720 = vmatpush1.msra.mxu0 0.0
    %1721 = vmatprep.subr.mxu0 0.0
    %1722 = vmatpush1.msra.mxu0 0.0
    %1723 = vmatprep.subr.mxu0 0.0
    %1724 = vmatpush1.msra.mxu0 0.0
    %1725 = vmatprep.subr.mxu0 0.0
    %1726 = vmatpush1.msra.mxu0 0.0
    %1727 = vmatprep.subr.mxu0 0.0
    %1728 = vmatpush1.msra.mxu0 0.0
    %1729 = vmatprep.subr.mxu0 0.0
    %1730 = vmatpush1.msra.mxu0 0.0
    %1731 = vmatprep.subr.mxu0 0.0
    %1732 = vmatpush1.msra.mxu0 0.0
    %1733 = vmatprep.subr.mxu0 0.0
    %1734 = vmatpush1.msra.mxu0 0.0
    %1735 = vmatprep.subr.mxu0 0.0
    %1736 = vmatpush1.msra.mxu0 0.0
    %1737 = vmatprep.mubr.f32.mxu0 0.0
    %1738 = vmatmul.mubr.f32.gmra.mrb[0].mxu0 %v1541
    %v1739 = vpop.f32.mrb[0].mxu0
    %v1740 = vadd.f32 %v1646, %v1739
    %v1741 = vpop.f32.mrb[0].mxu0
    %v1742 = vadd.f32 %v1650, %v1741
    %1743 = vmatprep.mubr.f32.mxu0 0.0
    %1744 = vmatmul.mubr.f32.gmra.mrb[0].mxu0 %v1542
    %v1745 = vpop.f32.mrb[0].mxu0
    %v1746 = vadd.f32 %v1646, %v1745
    %v1747 = vpop.f32.mrb[0].mxu0
    %v1748 = vadd.f32 %v1650, %v1747
    %1749 = vdwg.mxu0
    %1750 = vmatprep.subr.mxu0 %v1547
    %1751 = vmatpush1.msra.mxu0 %v1546
    %1752 = vmatprep.subr.mxu0 %v1553
    %1753 = vmatpush1.msra.mxu0 %v1552
    %1754 = vmatprep.subr.mxu0 %v1559
    %1755 = vmatpush1.msra.mxu0 %v1558
    %1756 = vmatprep.subr.mxu0 %v1565
    %1757 = vmatpush1.msra.mxu0 %v1564
    %1758 = vmatprep.subr.mxu0 %v1571
    %1759 = vmatpush1.msra.mxu0 %v1570
    %1760 = vmatprep.subr.mxu0 %v1577
    %1761 = vmatpush1.msra.mxu0 %v1576
    %1762 = vmatprep.subr.mxu0 %v1583
    %1763 = vmatpush1.msra.mxu0 %v1582
    %1764 = vmatprep.subr.mxu0 %v1589
    %1765 = vmatpush1.msra.mxu0 %v1588
    %1766 = vmatprep.subr.mxu0 %v1595
    %1767 = vmatpush1.msra.mxu0 %v1594
    %1768 = vmatprep.subr.mxu0 %v1601
    %1769 = vmatpush1.msra.mxu0 %v1600
    %1770 = vmatprep.subr.mxu0 %v1607
    %1771 = vmatpush1.msra.mxu0 %v1606
    %1772 = vmatprep.subr.mxu0 %v1613
    %1773 = vmatpush1.msra.mxu0 %v1612
    %1774 = vmatprep.subr.mxu0 %v1619
    %1775 = vmatpush1.msra.mxu0 %v1618
    %1776 = vmatprep.subr.mxu0 %v1625
    %1777 = vmatpush1.msra.mxu0 %v1624
    %1778 = vmatprep.subr.mxu0 %v1631
    %1779 = vmatpush1.msra.mxu0 %v1630
    %1780 = vmatprep.subr.mxu0 %v1637
    %1781 = vmatpush1.msra.mxu0 %v1636
    %1782 = vmatprep.subr.mxu0 0.0
    %1783 = vmatpush1.msra.mxu0 0.0
    %1784 = vmatprep.subr.mxu0 0.0
    %1785 = vmatpush1.msra.mxu0 0.0
    %1786 = vmatprep.subr.mxu0 0.0
    %1787 = vmatpush1.msra.mxu0 0.0
    %1788 = vmatprep.subr.mxu0 0.0
    %1789 = vmatpush1.msra.mxu0 0.0
    %1790 = vmatprep.subr.mxu0 0.0
    %1791 = vmatpush1.msra.mxu0 0.0
    %1792 = vmatprep.subr.mxu0 0.0
    %1793 = vmatpush1.msra.mxu0 0.0
    %1794 = vmatprep.subr.mxu0 0.0
    %1795 = vmatpush1.msra.mxu0 0.0
    %1796 = vmatprep.subr.mxu0 0.0
    %1797 = vmatpush1.msra.mxu0 0.0
    %1798 = vmatprep.subr.mxu0 0.0
    %1799 = vmatpush1.msra.mxu0 0.0
    %1800 = vmatprep.subr.mxu0 0.0
    %1801 = vmatpush1.msra.mxu0 0.0
    %1802 = vmatprep.subr.mxu0 0.0
    %1803 = vmatpush1.msra.mxu0 0.0
    %1804 = vmatprep.subr.mxu0 0.0
    %1805 = vmatpush1.msra.mxu0 0.0
    %1806 = vmatprep.subr.mxu0 0.0
    %1807 = vmatpush1.msra.mxu0 0.0
    %1808 = vmatprep.subr.mxu0 0.0
    %1809 = vmatpush1.msra.mxu0 0.0
    %1810 = vmatprep.subr.mxu0 0.0
    %1811 = vmatpush1.msra.mxu0 0.0
    %1812 = vmatprep.subr.mxu0 0.0
    %1813 = vmatpush1.msra.mxu0 0.0
    %1814 = vmatprep.mubr.f32.mxu0 0.0
    %1815 = vmatmul.mubr.f32.gmra.mrb[0].mxu0 %v1541
    %v1816 = vpop.f32.mrb[0].mxu0
    %v1817 = vadd.f32 %v1654, %v1816
    %v1818 = vpop.f32.mrb[0].mxu0
    %v1819 = vadd.f32 %v1658, %v1818
    %1820 = vmatprep.mubr.f32.mxu0 0.0
    %1821 = vmatmul.mubr.f32.gmra.mrb[0].mxu0 %v1542
    %v1822 = vpop.f32.mrb[0].mxu0
    %v1823 = vadd.f32 %v1654, %v1822
    %v1824 = vpop.f32.mrb[0].mxu0
    %v1825 = vadd.f32 %v1658, %v1824
    %1826 = vdwg.mxu0
    %1827 = vmatprep.subr.mxu0 %v1549
    %1828 = vmatpush1.msra.mxu0 %v1548
    %1829 = vmatprep.subr.mxu0 %v1555
    %1830 = vmatpush1.msra.mxu0 %v1554
    %1831 = vmatprep.subr.mxu0 %v1561
    %1832 = vmatpush1.msra.mxu0 %v1560
    %1833 = vmatprep.subr.mxu0 %v1567
    %1834 = vmatpush1.msra.mxu0 %v1566
    %1835 = vmatprep.subr.mxu0 %v1573
    %1836 = vmatpush1.msra.mxu0 %v1572
    %1837 = vmatprep.subr.mxu0 %v1579
    %1838 = vmatpush1.msra.mxu0 %v1578
    %1839 = vmatprep.subr.mxu0 %v1585
    %1840 = vmatpush1.msra.mxu0 %v1584
    %1841 = vmatprep.subr.mxu0 %v1591
    %1842 = vmatpush1.msra.mxu0 %v1590
    %1843 = vmatprep.subr.mxu0 %v1597
    %1844 = vmatpush1.msra.mxu0 %v1596
    %1845 = vmatprep.subr.mxu0 %v1603
    %1846 = vmatpush1.msra.mxu0 %v1602
    %1847 = vmatprep.subr.mxu0 %v1609
    %1848 = vmatpush1.msra.mxu0 %v1608
    %1849 = vmatprep.subr.mxu0 %v1615
    %1850 = vmatpush1.msra.mxu0 %v1614
    %1851 = vmatprep.subr.mxu0 %v1621
    %1852 = vmatpush1.msra.mxu0 %v1620
    %1853 = vmatprep.subr.mxu0 %v1627
    %1854 = vmatpush1.msra.mxu0 %v1626
    %1855 = vmatprep.subr.mxu0 %v1633
    %1856 = vmatpush1.msra.mxu0 %v1632
    %1857 = vmatprep.subr.mxu0 %v1639
    %1858 = vmatpush1.msra.mxu0 %v1638
    %1859 = vmatprep.subr.mxu0 0.0
    %1860 = vmatpush1.msra.mxu0 0.0
    %1861 = vmatprep.subr.mxu0 0.0
    %1862 = vmatpush1.msra.mxu0 0.0
    %1863 = vmatprep.subr.mxu0 0.0
    %1864 = vmatpush1.msra.mxu0 0.0
    %1865 = vmatprep.subr.mxu0 0.0
    %1866 = vmatpush1.msra.mxu0 0.0
    %1867 = vmatprep.subr.mxu0 0.0
    %1868 = vmatpush1.msra.mxu0 0.0
    %1869 = vmatprep.subr.mxu0 0.0
    %1870 = vmatpush1.msra.mxu0 0.0
    %1871 = vmatprep.subr.mxu0 0.0
    %1872 = vmatpush1.msra.mxu0 0.0
    %1873 = vmatprep.subr.mxu0 0.0
    %1874 = vmatpush1.msra.mxu0 0.0
    %1875 = vmatprep.subr.mxu0 0.0
    %1876 = vmatpush1.msra.mxu0 0.0
    %1877 = vmatprep.subr.mxu0 0.0
    %1878 = vmatpush1.msra.mxu0 0.0
    %1879 = vmatprep.subr.mxu0 0.0
    %1880 = vmatpush1.msra.mxu0 0.0
    %1881 = vmatprep.subr.mxu0 0.0
    %1882 = vmatpush1.msra.mxu0 0.0
    %1883 = vmatprep.subr.mxu0 0.0
    %1884 = vmatpush1.msra.mxu0 0.0
    %1885 = vmatprep.subr.mxu0 0.0
    %1886 = vmatpush1.msra.mxu0 0.0
    %1887 = vmatprep.subr.mxu0 0.0
    %1888 = vmatpush1.msra.mxu0 0.0
    %1889 = vmatprep.subr.mxu0 0.0
    %1890 = vmatpush1.msra.mxu0 0.0
    %1891 = vmatprep.mubr.f32.mxu0 0.0
    %1892 = vmatmul.mubr.f32.gmra.mrb[0].mxu0 %v1541
    %v1893 = vpop.f32.mrb[0].mxu0
    %v1894 = vadd.f32 %v1662, %v1893
    %v1895 = vpop.f32.mrb[0].mxu0
    %v1896 = vadd.f32 %v1666, %v1895
    %1897 = vmatprep.mubr.f32.mxu0 0.0
    %1898 = vmatmul.mubr.f32.gmra.mrb[0].mxu0 %v1542
    %v1899 = vpop.f32.mrb[0].mxu0
    %v1900 = vadd.f32 %v1662, %v1899
    %v1901 = vpop.f32.mrb[0].mxu0
    %v1902 = vadd.f32 %v1666, %v1901
    %1903 = vdwg.mxu0
    %v1904 = vmul.f32 %v1740, %v1740
    %v1905 = vmul.f32 %v1742, %v1742
    %v1906 = vmul.f32 %v1746, %v1746
    %v1907 = vmul.f32 %v1748, %v1748
    %v1908 = vadd.f32 %v1904, %v1905
    %v1909 = vadd.f32 %v1908, %v1906
    %v1910 = vadd.f32 %v1909, %v1907
    %1911 = vadd.xlane.f32.xlu0 %v1910
    %v1912 = vpop.xlane.xlu0 %1911
    %v1913 = vrot.slane %v1912, 4
    %v1914 = vadd.f32 %v1912, %v1913
    %v1915 = vrot.slane %v1914, 2
    %v1916 = vadd.f32 %v1914, %v1915
    %v1917 = vrot.slane %v1916, 1
    %v1918 = vadd.f32 %v1916, %v1917
    %s1919 = vtos %v1918
    %v1920 = vstv %s1919
    %v1921 = vrsqrt.pop %v1920
    %s1922 = vtos %v1921
    %v1923 = vstv %s1922
    %v1924 = vmul.f32 %v1740, %v1923
    %v1925 = vmul.f32 %v1742, %v1923
    %v1926 = vmul.f32 %v1746, %v1923
    %v1927 = vmul.f32 %v1748, %v1923
    %v1928 = vmul.f32 %v1817, %v1817
    %v1929 = vmul.f32 %v1819, %v1819
    %v1930 = vmul.f32 %v1823, %v1823
    %v1931 = vmul.f32 %v1825, %v1825
    %v1932 = vadd.f32 %v1928, %v1929
    %v1933 = vadd.f32 %v1932, %v1930
    %v1934 = vadd.f32 %v1933, %v1931
    %1935 = vadd.xlane.f32.xlu0 %v1934
    %v1936 = vpop.xlane.xlu0 %1935
    %v1937 = vrot.slane %v1936, 4
    %v1938 = vadd.f32 %v1936, %v1937
    %v1939 = vrot.slane %v1938, 2
    %v1940 = vadd.f32 %v1938, %v1939
    %v1941 = vrot.slane %v1940, 1
    %v1942 = vadd.f32 %v1940, %v1941
    %s1943 = vtos %v1942
    %v1944 = vstv %s1943
    %v1945 = vrsqrt.pop %v1944
    %s1946 = vtos %v1945
    %v1947 = vstv %s1946
    %v1948 = vmul.f32 %v1817, %v1947
    %v1949 = vmul.f32 %v1819, %v1947
    %v1950 = vmul.f32 %v1823, %v1947
    %v1951 = vmul.f32 %v1825, %v1947
    %1952 = vxpose.xlu0.b32.start [1/16] %v1948, 128
    %1953 = vxpose.xlu0.b32.cont [2/16] %v1950, 128
    %1954 = vxpose.xlu0.b32.cont [3/16] 0.0, 128
    %1955 = vxpose.xlu0.b32.cont [4/16] 0.0, 128
    %1956 = vxpose.xlu0.b32.cont [5/16] 0.0, 128
    %1957 = vxpose.xlu0.b32.cont [6/16] 0.0, 128
    %1958 = vxpose.xlu0.b32.cont [7/16] 0.0, 128
    %1959 = vxpose.xlu0.b32.cont [8/16] 0.0, 128
    %1960 = vxpose.xlu0.b32.cont [9/16] 0.0, 128
    %1961 = vxpose.xlu0.b32.cont [10/16] 0.0, 128
    %1962 = vxpose.xlu0.b32.cont [11/16] 0.0, 128
    %1963 = vxpose.xlu0.b32.cont [12/16] 0.0, 128
    %1964 = vxpose.xlu0.b32.cont [13/16] 0.0, 128
    %1965 = vxpose.xlu0.b32.cont [14/16] 0.0, 128
    %1966 = vxpose.xlu0.b32.cont [15/16] 0.0, 128
    %1967 = vxpose.xlu0.b32.end [16/16] 0.0, 128
    %v1968 = vpop.trf.xlu0
    %v1969 = vpop.trf.xlu0
    %v1970 = vpop.trf.xlu0
    %v1971 = vpop.trf.xlu0
    %v1972 = vpop.trf.xlu0
    %v1973 = vpop.trf.xlu0
    %v1974 = vpop.trf.xlu0
    %v1975 = vpop.trf.xlu0
    %v1976 = vpop.trf.xlu0
    %v1977 = vpop.trf.xlu0
    %v1978 = vpop.trf.xlu0
    %v1979 = vpop.trf.xlu0
    %v1980 = vpop.trf.xlu0
    %v1981 = vpop.trf.xlu0
    %v1982 = vpop.trf.xlu0
    %v1983 = vpop.trf.xlu0
    %1984 = vxpose.xlu0.b32.start [1/16] %v1949, 128
    %1985 = vxpose.xlu0.b32.cont [2/16] %v1951, 128
    %1986 = vxpose.xlu0.b32.cont [3/16] 0.0, 128
    %1987 = vxpose.xlu0.b32.cont [4/16] 0.0, 128
    %1988 = vxpose.xlu0.b32.cont [5/16] 0.0, 128
    %1989 = vxpose.xlu0.b32.cont [6/16] 0.0, 128
    %1990 = vxpose.xlu0.b32.cont [7/16] 0.0, 128
    %1991 = vxpose.xlu0.b32.cont [8/16] 0.0, 128
    %1992 = vxpose.xlu0.b32.cont [9/16] 0.0, 128
    %1993 = vxpose.xlu0.b32.cont [10/16] 0.0, 128
    %1994 = vxpose.xlu0.b32.cont [11/16] 0.0, 128
    %1995 = vxpose.xlu0.b32.cont [12/16] 0.0, 128
    %1996 = vxpose.xlu0.b32.cont [13/16] 0.0, 128
    %1997 = vxpose.xlu0.b32.cont [14/16] 0.0, 128
    %1998 = vxpose.xlu0.b32.cont [15/16] 0.0, 128
    %1999 = vxpose.xlu0.b32.end [16/16] 0.0, 128
    %v2000 = vpop.trf.xlu0
    %v2001 = vpop.trf.xlu0
    %v2002 = vpop.trf.xlu0
    %v2003 = vpop.trf.xlu0
    %v2004 = vpop.trf.xlu0
    %v2005 = vpop.trf.xlu0
    %v2006 = vpop.trf.xlu0
    %v2007 = vpop.trf.xlu0
    %v2008 = vpop.trf.xlu0
    %v2009 = vpop.trf.xlu0
    %v2010 = vpop.trf.xlu0
    %v2011 = vpop.trf.xlu0
    %v2012 = vpop.trf.xlu0
    %v2013 = vpop.trf.xlu0
    %v2014 = vpop.trf.xlu0
    %v2015 = vpop.trf.xlu0
    %v2017 = vsel %vm820, %v1968, 0
    %v2020 = vsel %vm820, %v1969, 0
    %v2023 = vsel %vm820, %v1970, 0
    %v2026 = vsel %vm820, %v1971, 0
    %v2029 = vsel %vm820, %v1972, 0
    %v2032 = vsel %vm820, %v1973, 0
    %v2035 = vsel %vm820, %v1974, 0
    %v2038 = vsel %vm820, %v1975, 0
    %v2041 = vsel %vm820, %v1976, 0
    %v2044 = vsel %vm820, %v1977, 0
    %v2047 = vsel %vm820, %v1978, 0
    %v2050 = vsel %vm820, %v1979, 0
    %v2053 = vsel %vm820, %v1980, 0
    %v2056 = vsel %vm820, %v1981, 0
    %v2059 = vsel %vm820, %v1982, 0
    %v2062 = vsel %vm820, %v1983, 0
    %v2065 = vsel %vm820, %v2000, 0
    %v2068 = vsel %vm820, %v2001, 0
    %v2071 = vsel %vm820, %v2002, 0
    %v2074 = vsel %vm820, %v2003, 0
    %v2077 = vsel %vm820, %v2004, 0
    %v2080 = vsel %vm820, %v2005, 0
    %v2083 = vsel %vm820, %v2006, 0
    %v2086 = vsel %vm820, %v2007, 0
    %v2089 = vsel %vm820, %v2008, 0
    %v2092 = vsel %vm820, %v2009, 0
    %v2095 = vsel %vm820, %v2010, 0
    %v2098 = vsel %vm820, %v2011, 0
    %v2101 = vsel %vm820, %v2012, 0
    %v2104 = vsel %vm820, %v2013, 0
    %v2107 = vsel %vm820, %v2014, 0
    %v2110 = vsel %vm820, %v2015, 0
    %2112 = vmatprep.subr.mxu0 %v1896
    %2113 = vmatpush1.msra.mxu0 %v1894
    %2114 = vmatprep.subr.mxu0 %v1902
    %2115 = vmatpush1.msra.mxu0 %v1900
    %2116 = vmatprep.subr.mxu0 0.0
    %2117 = vmatpush1.msra.mxu0 0.0
    %2118 = vmatprep.subr.mxu0 0.0
    %2119 = vmatpush1.msra.mxu0 0.0
    %2120 = vmatprep.subr.mxu0 0.0
    %2121 = vmatpush1.msra.mxu0 0.0
    %2122 = vmatprep.subr.mxu0 0.0
    %2123 = vmatpush1.msra.mxu0 0.0
    %2124 = vmatprep.subr.mxu0 0.0
    %2125 = vmatpush1.msra.mxu0 0.0
    %2126 = vmatprep.subr.mxu0 0.0
    %2127 = vmatpush1.msra.mxu0 0.0
    %2128 = vmatprep.subr.mxu0 0.0
    %2129 = vmatpush1.msra.mxu0 0.0
    %2130 = vmatprep.subr.mxu0 0.0
    %2131 = vmatpush1.msra.mxu0 0.0
    %2132 = vmatprep.subr.mxu0 0.0
    %2133 = vmatpush1.msra.mxu0 0.0
    %2134 = vmatprep.subr.mxu0 0.0
    %2135 = vmatpush1.msra.mxu0 0.0
    %2136 = vmatprep.subr.mxu0 0.0
    %2137 = vmatpush1.msra.mxu0 0.0
    %2138 = vmatprep.subr.mxu0 0.0
    %2139 = vmatpush1.msra.mxu0 0.0
    %2140 = vmatprep.subr.mxu0 0.0
    %2141 = vmatpush1.msra.mxu0 0.0
    %2142 = vmatprep.subr.mxu0 0.0
    %2143 = vmatpush1.msra.mxu0 0.0
    %2144 = vmatprep.subr.mxu0 0.0
    %2145 = vmatpush1.msra.mxu0 0.0
    %2146 = vmatprep.subr.mxu0 0.0
    %2147 = vmatpush1.msra.mxu0 0.0
    %2148 = vmatprep.subr.mxu0 0.0
    %2149 = vmatpush1.msra.mxu0 0.0
    %2150 = vmatprep.subr.mxu0 0.0
    %2151 = vmatpush1.msra.mxu0 0.0
    %2152 = vmatprep.subr.mxu0 0.0
    %2153 = vmatpush1.msra.mxu0 0.0
    %2154 = vmatprep.subr.mxu0 0.0
    %2155 = vmatpush1.msra.mxu0 0.0
    %2156 = vmatprep.subr.mxu0 0.0
    %2157 = vmatpush1.msra.mxu0 0.0
    %2158 = vmatprep.subr.mxu0 0.0
    %2159 = vmatpush1.msra.mxu0 0.0
    %2160 = vmatprep.subr.mxu0 0.0
    %2161 = vmatpush1.msra.mxu0 0.0
    %2162 = vmatprep.subr.mxu0 0.0
    %2163 = vmatpush1.msra.mxu0 0.0
    %2164 = vmatprep.subr.mxu0 0.0
    %2165 = vmatpush1.msra.mxu0 0.0
    %2166 = vmatprep.subr.mxu0 0.0
    %2167 = vmatpush1.msra.mxu0 0.0
    %2168 = vmatprep.subr.mxu0 0.0
    %2169 = vmatpush1.msra.mxu0 0.0
    %2170 = vmatprep.subr.mxu0 0.0
    %2171 = vmatpush1.msra.mxu0 0.0
    %2172 = vmatprep.subr.mxu0 0.0
    %2173 = vmatpush1.msra.mxu0 0.0
    %2174 = vmatprep.subr.mxu0 0.0
    %2175 = vmatpush1.msra.mxu0 0.0
    %2176 = vmatprep.mubr.f32.mxu0 0.0
    %2177 = vmatmul.mubr.f32.gmra.mrb[0].mxu0 %v2017
    %v2178 = vpop.f32.mrb[0].mxu0
    %v2179 = vadd.f32 0.0, %v2178
    %v2180 = vpop.f32.mrb[0].mxu0
    %v2181 = vadd.f32 0.0, %v2180
    %2182 = vmatprep.mubr.f32.mxu0 0.0
    %2183 = vmatmul.mubr.f32.gmra.mrb[0].mxu0 %v2020
    %v2184 = vpop.f32.mrb[0].mxu0
    %v2185 = vadd.f32 0.0, %v2184
    %v2186 = vpop.f32.mrb[0].mxu0
    %v2187 = vadd.f32 0.0, %v2186
    %2188 = vmatprep.mubr.f32.mxu0 0.0
    %2189 = vmatmul.mubr.f32.gmra.mrb[0].mxu0 %v2023
    %v2190 = vpop.f32.mrb[0].mxu0
    %v2191 = vadd.f32 0.0, %v2190
    %v2192 = vpop.f32.mrb[0].mxu0
    %v2193 = vadd.f32 0.0, %v2192
    %2194 = vmatprep.mubr.f32.mxu0 0.0
    %2195 = vmatmul.mubr.f32.gmra.mrb[0].mxu0 %v2026
    %v2196 = vpop.f32.mrb[0].mxu0
    %v2197 = vadd.f32 0.0, %v2196
    %v2198 = vpop.f32.mrb[0].mxu0
    %v2199 = vadd.f32 0.0, %v2198
    %2200 = vmatprep.mubr.f32.mxu0 0.0
    %2201 = vmatmul.mubr.f32.gmra.mrb[0].mxu0 %v2029
    %v2202 = vpop.f32.mrb[0].mxu0
    %v2203 = vadd.f32 0.0, %v2202
    %v2204 = vpop.f32.mrb[0].mxu0
    %v2205 = vadd.f32 0.0, %v2204
    %2206 = vmatprep.mubr.f32.mxu0 0.0
    %2207 = vmatmul.mubr.f32.gmra.mrb[0].mxu0 %v2032
    %v2208 = vpop.f32.mrb[0].mxu0
    %v2209 = vadd.f32 0.0, %v2208
    %v2210 = vpop.f32.mrb[0].mxu0
    %v2211 = vadd.f32 0.0, %v2210
    %2212 = vmatprep.mubr.f32.mxu0 0.0
    %2213 = vmatmul.mubr.f32.gmra.mrb[0].mxu0 %v2035
    %v2214 = vpop.f32.mrb[0].mxu0
    %v2215 = vadd.f32 0.0, %v2214
    %v2216 = vpop.f32.mrb[0].mxu0
    %v2217 = vadd.f32 0.0, %v2216
    %2218 = vmatprep.mubr.f32.mxu0 0.0
    %2219 = vmatmul.mubr.f32.gmra.mrb[0].mxu0 %v2038
    %v2220 = vpop.f32.mrb[0].mxu0
    %v2221 = vadd.f32 0.0, %v2220
    %v2222 = vpop.f32.mrb[0].mxu0
    %v2223 = vadd.f32 0.0, %v2222
    %2224 = vmatprep.mubr.f32.mxu0 0.0
    %2225 = vmatmul.mubr.f32.gmra.mrb[0].mxu0 %v2041
    %v2226 = vpop.f32.mrb[0].mxu0
    %v2227 = vadd.f32 0.0, %v2226
    %v2228 = vpop.f32.mrb[0].mxu0
    %v2229 = vadd.f32 0.0, %v2228
    %2230 = vmatprep.mubr.f32.mxu0 0.0
    %2231 = vmatmul.mubr.f32.gmra.mrb[0].mxu0 %v2044
    %v2232 = vpop.f32.mrb[0].mxu0
    %v2233 = vadd.f32 0.0, %v2232
    %v2234 = vpop.f32.mrb[0].mxu0
    %v2235 = vadd.f32 0.0, %v2234
    %2236 = vmatprep.mubr.f32.mxu0 0.0
    %2237 = vmatmul.mubr.f32.gmra.mrb[0].mxu0 %v2047
    %v2238 = vpop.f32.mrb[0].mxu0
    %v2239 = vadd.f32 0.0, %v2238
    %v2240 = vpop.f32.mrb[0].mxu0
    %v2241 = vadd.f32 0.0, %v2240
    %2242 = vmatprep.mubr.f32.mxu0 0.0
    %2243 = vmatmul.mubr.f32.gmra.mrb[0].mxu0 %v2050
    %v2244 = vpop.f32.mrb[0].mxu0
    %v2245 = vadd.f32 0.0, %v2244
    %v2246 = vpop.f32.mrb[0].mxu0
    %v2247 = vadd.f32 0.0, %v2246
    %2248 = vmatprep.mubr.f32.mxu0 0.0
    %2249 = vmatmul.mubr.f32.gmra.mrb[0].mxu0 %v2053
    %v2250 = vpop.f32.mrb[0].mxu0
    %v2251 = vadd.f32 0.0, %v2250
    %v2252 = vpop.f32.mrb[0].mxu0
    %v2253 = vadd.f32 0.0, %v2252
    %2254 = vmatprep.mubr.f32.mxu0 0.0
    %2255 = vmatmul.mubr.f32.gmra.mrb[0].mxu0 %v2056
    %v2256 = vpop.f32.mrb[0].mxu0
    %v2257 = vadd.f32 0.0, %v2256
    %v2258 = vpop.f32.mrb[0].mxu0
    %v2259 = vadd.f32 0.0, %v2258
    %2260 = vmatprep.mubr.f32.mxu0 0.0
    %2261 = vmatmul.mubr.f32.gmra.mrb[0].mxu0 %v2059
    %v2262 = vpop.f32.mrb[0].mxu0
    %v2263 = vadd.f32 0.0, %v2262
    %v2264 = vpop.f32.mrb[0].mxu0
    %v2265 = vadd.f32 0.0, %v2264
    %2266 = vmatprep.mubr.f32.mxu0 0.0
    %2267 = vmatmul.mubr.f32.gmra.mrb[0].mxu0 %v2062
    %v2268 = vpop.f32.mrb[0].mxu0
    %v2269 = vadd.f32 0.0, %v2268
    %v2270 = vpop.f32.mrb[0].mxu0
    %v2271 = vadd.f32 0.0, %v2270
    %2272 = vmatprep.mubr.f32.mxu0 0.0
    %2273 = vmatmul.mubr.f32.gmra.mrb[0].mxu0 %v2065
    %v2274 = vpop.f32.mrb[0].mxu0
    %v2275 = vadd.f32 0.0, %v2274
    %v2276 = vpop.f32.mrb[0].mxu0
    %v2277 = vadd.f32 0.0, %v2276
    %2278 = vmatprep.mubr.f32.mxu0 0.0
    %2279 = vmatmul.mubr.f32.gmra.mrb[0].mxu0 %v2068
    %v2280 = vpop.f32.mrb[0].mxu0
    %v2281 = vadd.f32 0.0, %v2280
    %v2282 = vpop.f32.mrb[0].mxu0
    %v2283 = vadd.f32 0.0, %v2282
    %2284 = vmatprep.mubr.f32.mxu0 0.0
    %2285 = vmatmul.mubr.f32.gmra.mrb[0].mxu0 %v2071
    %v2286 = vpop.f32.mrb[0].mxu0
    %v2287 = vadd.f32 0.0, %v2286
    %v2288 = vpop.f32.mrb[0].mxu0
    %v2289 = vadd.f32 0.0, %v2288
    %2290 = vmatprep.mubr.f32.mxu0 0.0
    %2291 = vmatmul.mubr.f32.gmra.mrb[0].mxu0 %v2074
    %v2292 = vpop.f32.mrb[0].mxu0
    %v2293 = vadd.f32 0.0, %v2292
    %v2294 = vpop.f32.mrb[0].mxu0
    %v2295 = vadd.f32 0.0, %v2294
    %2296 = vmatprep.mubr.f32.mxu0 0.0
    %2297 = vmatmul.mubr.f32.gmra.mrb[0].mxu0 %v2077
    %v2298 = vpop.f32.mrb[0].mxu0
    %v2299 = vadd.f32 0.0, %v2298
    %v2300 = vpop.f32.mrb[0].mxu0
    %v2301 = vadd.f32 0.0, %v2300
    %2302 = vmatprep.mubr.f32.mxu0 0.0
    %2303 = vmatmul.mubr.f32.gmra.mrb[0].mxu0 %v2080
    %v2304 = vpop.f32.mrb[0].mxu0
    %v2305 = vadd.f32 0.0, %v2304
    %v2306 = vpop.f32.mrb[0].mxu0
    %v2307 = vadd.f32 0.0, %v2306
    %2308 = vmatprep.mubr.f32.mxu0 0.0
    %2309 = vmatmul.mubr.f32.gmra.mrb[0].mxu0 %v2083
    %v2310 = vpop.f32.mrb[0].mxu0
    %v2311 = vadd.f32 0.0, %v2310
    %v2312 = vpop.f32.mrb[0].mxu0
    %v2313 = vadd.f32 0.0, %v2312
    %2314 = vmatprep.mubr.f32.mxu0 0.0
    %2315 = vmatmul.mubr.f32.gmra.mrb[0].mxu0 %v2086
    %v2316 = vpop.f32.mrb[0].mxu0
    %v2317 = vadd.f32 0.0, %v2316
    %v2318 = vpop.f32.mrb[0].mxu0
    %v2319 = vadd.f32 0.0, %v2318
    %2320 = vmatprep.mubr.f32.mxu0 0.0
    %2321 = vmatmul.mubr.f32.gmra.mrb[0].mxu0 %v2089
    %v2322 = vpop.f32.mrb[0].mxu0
    %v2323 = vadd.f32 0.0, %v2322
    %v2324 = vpop.f32.mrb[0].mxu0
    %v2325 = vadd.f32 0.0, %v2324
    %2326 = vmatprep.mubr.f32.mxu0 0.0
    %2327 = vmatmul.mubr.f32.gmra.mrb[0].mxu0 %v2092
    %v2328 = vpop.f32.mrb[0].mxu0
    %v2329 = vadd.f32 0.0, %v2328
    %v2330 = vpop.f32.mrb[0].mxu0
    %v2331 = vadd.f32 0.0, %v2330
    %2332 = vmatprep.mubr.f32.mxu0 0.0
    %2333 = vmatmul.mubr.f32.gmra.mrb[0].mxu0 %v2095
    %v2334 = vpop.f32.mrb[0].mxu0
    %v2335 = vadd.f32 0.0, %v2334
    %v2336 = vpop.f32.mrb[0].mxu0
    %v2337 = vadd.f32 0.0, %v2336
    %2338 = vmatprep.mubr.f32.mxu0 0.0
    %2339 = vmatmul.mubr.f32.gmra.mrb[0].mxu0 %v2098
    %v2340 = vpop.f32.mrb[0].mxu0
    %v2341 = vadd.f32 0.0, %v2340
    %v2342 = vpop.f32.mrb[0].mxu0
    %v2343 = vadd.f32 0.0, %v2342
    %2344 = vmatprep.mubr.f32.mxu0 0.0
    %2345 = vmatmul.mubr.f32.gmra.mrb[0].mxu0 %v2101
    %v2346 = vpop.f32.mrb[0].mxu0
    %v2347 = vadd.f32 0.0, %v2346
    %v2348 = vpop.f32.mrb[0].mxu0
    %v2349 = vadd.f32 0.0, %v2348
    %2350 = vmatprep.mubr.f32.mxu0 0.0
    %2351 = vmatmul.mubr.f32.gmra.mrb[0].mxu0 %v2104
    %v2352 = vpop.f32.mrb[0].mxu0
    %v2353 = vadd.f32 0.0, %v2352
    %v2354 = vpop.f32.mrb[0].mxu0
    %v2355 = vadd.f32 0.0, %v2354
    %2356 = vmatprep.mubr.f32.mxu0 0.0
    %2357 = vmatmul.mubr.f32.gmra.mrb[0].mxu0 %v2107
    %v2358 = vpop.f32.mrb[0].mxu0
    %v2359 = vadd.f32 0.0, %v2358
    %v2360 = vpop.f32.mrb[0].mxu0
    %v2361 = vadd.f32 0.0, %v2360
    %2362 = vmatprep.mubr.f32.mxu0 0.0
    %2363 = vmatmul.mubr.f32.gmra.mrb[0].mxu0 %v2110
    %v2364 = vpop.f32.mrb[0].mxu0
    %v2365 = vadd.f32 0.0, %v2364
    %v2366 = vpop.f32.mrb[0].mxu0
    %v2367 = vadd.f32 0.0, %v2366
    %2368 = vdwg.mxu0
    %v2369 = vmul.f32 %v2179, %v109
    %v2370 = vmul.f32 %v2181, %v110
    %v2371 = vmul.f32 %v2185, %v111
    %v2372 = vmul.f32 %v2187, %v112
    %v2373 = vmul.f32 %v2191, %v113
    %v2374 = vmul.f32 %v2193, %v114
    %v2375 = vmul.f32 %v2197, %v115
    %v2376 = vmul.f32 %v2199, %v116
    %v2377 = vmul.f32 %v2203, %v117
    %v2378 = vmul.f32 %v2205, %v118
    %v2379 = vmul.f32 %v2209, %v119
    %v2380 = vmul.f32 %v2211, %v120
    %v2381 = vmul.f32 %v2215, %v121
    %v2382 = vmul.f32 %v2217, %v122
    %v2383 = vmul.f32 %v2221, %v123
    %v2384 = vmul.f32 %v2223, %v124
    %v2385 = vmul.f32 %v2227, %v125
    %v2386 = vmul.f32 %v2229, %v126
    %v2387 = vmul.f32 %v2233, %v127
    %v2388 = vmul.f32 %v2235, %v128
    %v2389 = vmul.f32 %v2239, %v129
    %v2390 = vmul.f32 %v2241, %v130
    %v2391 = vmul.f32 %v2245, %v131
    %v2392 = vmul.f32 %v2247, %v132
    %v2393 = vmul.f32 %v2251, %v133
    %v2394 = vmul.f32 %v2253, %v134
    %v2395 = vmul.f32 %v2257, %v135
    %v2396 = vmul.f32 %v2259, %v136
    %v2397 = vmul.f32 %v2263, %v137
    %v2398 = vmul.f32 %v2265, %v138
    %v2399 = vmul.f32 %v2269, %v139
    %v2400 = vmul.f32 %v2271, %v140
    %v2401 = vmul.f32 %v2275, %v141
    %v2402 = vmul.f32 %v2277, %v142
    %v2403 = vmul.f32 %v2281, %v143
    %v2404 = vmul.f32 %v2283, %v144
    %v2405 = vmul.f32 %v2287, %v145
    %v2406 = vmul.f32 %v2289, %v146
    %v2407 = vmul.f32 %v2293, %v147
    %v2408 = vmul.f32 %v2295, %v148
    %v2409 = vmul.f32 %v2299, %v149
    %v2410 = vmul.f32 %v2301, %v150
    %v2411 = vmul.f32 %v2305, %v151
    %v2412 = vmul.f32 %v2307, %v152
    %v2413 = vmul.f32 %v2311, %v153
    %v2414 = vmul.f32 %v2313, %v154
    %v2415 = vmul.f32 %v2317, %v155
    %v2416 = vmul.f32 %v2319, %v156
    %v2417 = vmul.f32 %v2323, %v157
    %v2418 = vmul.f32 %v2325, %v158
    %v2419 = vmul.f32 %v2329, %v159
    %v2420 = vmul.f32 %v2331, %v160
    %v2421 = vmul.f32 %v2335, %v161
    %v2422 = vmul.f32 %v2337, %v162
    %v2423 = vmul.f32 %v2341, %v163
    %v2424 = vmul.f32 %v2343, %v164
    %v2425 = vmul.f32 %v2347, %v165
    %v2426 = vmul.f32 %v2349, %v166
    %v2427 = vmul.f32 %v2353, %v167
    %v2428 = vmul.f32 %v2355, %v168
    %v2429 = vmul.f32 %v2359, %v169
    %v2430 = vmul.f32 %v2361, %v170
    %v2431 = vmul.f32 %v2365, %v171
    %v2432 = vmul.f32 %v2367, %v172
    %v2433 = vmul.f32 %v1894, 16.0
    %v2434 = vmul.f32 %v1896, 16.0
    %v2435 = vmul.f32 %v1900, 16.0
    %v2436 = vmul.f32 %v1902, 16.0
    %2437 = vmatprep.subr.mxu0 %v2370
    %2438 = vmatpush1.msra.mxu0 %v2369
    %2439 = vmatprep.subr.mxu0 %v2372
    %2440 = vmatpush1.msra.mxu0 %v2371
    %2441 = vmatprep.subr.mxu0 %v2374
    %2442 = vmatpush1.msra.mxu0 %v2373
    %2443 = vmatprep.subr.mxu0 %v2376
    %2444 = vmatpush1.msra.mxu0 %v2375
    %2445 = vmatprep.subr.mxu0 %v2378
    %2446 = vmatpush1.msra.mxu0 %v2377
    %2447 = vmatprep.subr.mxu0 %v2380
    %2448 = vmatpush1.msra.mxu0 %v2379
    %2449 = vmatprep.subr.mxu0 %v2382
    %2450 = vmatpush1.msra.mxu0 %v2381
    %2451 = vmatprep.subr.mxu0 %v2384
    %2452 = vmatpush1.msra.mxu0 %v2383
    %2453 = vmatprep.subr.mxu0 %v2386
    %2454 = vmatpush1.msra.mxu0 %v2385
    %2455 = vmatprep.subr.mxu0 %v2388
    %2456 = vmatpush1.msra.mxu0 %v2387
    %2457 = vmatprep.subr.mxu0 %v2390
    %2458 = vmatpush1.msra.mxu0 %v2389
    %2459 = vmatprep.subr.mxu0 %v2392
    %2460 = vmatpush1.msra.mxu0 %v2391
    %2461 = vmatprep.subr.mxu0 %v2394
    %2462 = vmatpush1.msra.mxu0 %v2393
    %2463 = vmatprep.subr.mxu0 %v2396
    %2464 = vmatpush1.msra.mxu0 %v2395
    %2465 = vmatprep.subr.mxu0 %v2398
    %2466 = vmatpush1.msra.mxu0 %v2397
    %2467 = vmatprep.subr.mxu0 %v2400
    %2468 = vmatpush1.msra.mxu0 %v2399
    %2469 = vmatprep.subr.mxu0 %v2402
    %2470 = vmatpush1.msra.mxu0 %v2401
    %2471 = vmatprep.subr.mxu0 %v2404
    %2472 = vmatpush1.msra.mxu0 %v2403
    %2473 = vmatprep.subr.mxu0 %v2406
    %2474 = vmatpush1.msra.mxu0 %v2405
    %2475 = vmatprep.subr.mxu0 %v2408
    %2476 = vmatpush1.msra.mxu0 %v2407
    %2477 = vmatprep.subr.mxu0 %v2410
    %2478 = vmatpush1.msra.mxu0 %v2409
    %2479 = vmatprep.subr.mxu0 %v2412
    %2480 = vmatpush1.msra.mxu0 %v2411
    %2481 = vmatprep.subr.mxu0 %v2414
    %2482 = vmatpush1.msra.mxu0 %v2413
    %2483 = vmatprep.subr.mxu0 %v2416
    %2484 = vmatpush1.msra.mxu0 %v2415
    %2485 = vmatprep.subr.mxu0 %v2418
    %2486 = vmatpush1.msra.mxu0 %v2417
    %2487 = vmatprep.subr.mxu0 %v2420
    %2488 = vmatpush1.msra.mxu0 %v2419
    %2489 = vmatprep.subr.mxu0 %v2422
    %2490 = vmatpush1.msra.mxu0 %v2421
    %2491 = vmatprep.subr.mxu0 %v2424
    %2492 = vmatpush1.msra.mxu0 %v2423
    %2493 = vmatprep.subr.mxu0 %v2426
    %2494 = vmatpush1.msra.mxu0 %v2425
    %2495 = vmatprep.subr.mxu0 %v2428
    %2496 = vmatpush1.msra.mxu0 %v2427
    %2497 = vmatprep.subr.mxu0 %v2430
    %2498 = vmatpush1.msra.mxu0 %v2429
    %2499 = vmatprep.subr.mxu0 %v2432
    %2500 = vmatpush1.msra.mxu0 %v2431
    %2501 = vmatprep.mubr.f32.mxu0 %v1925
    %2502 = vmatmul.mubr.f32.gmra.mrb[0].mxu0 %v1924
    %v2503 = vpop.f32.mrb[0].mxu0
    %v2504 = vadd.f32 %v2433, %v2503
    %v2505 = vpop.f32.mrb[0].mxu0
    %v2506 = vadd.f32 %v2434, %v2505
    %2507 = vmatprep.mubr.f32.mxu0 %v1927
    %2508 = vmatmul.mubr.f32.gmra.mrb[0].mxu0 %v1926
    %v2509 = vpop.f32.mrb[0].mxu0
    %v2510 = vadd.f32 %v2435, %v2509
    %v2511 = vpop.f32.mrb[0].mxu0
    %v2512 = vadd.f32 %v2436, %v2511
    %2513 = vdwg.mxu0
    %v2514 = vadd.f32 %v1948, %v1950
    %v2515 = vrot.slane %v2514, 4
    %v2516 = vadd.f32 %v2514, %v2515
    %v2517 = vrot.slane %v2516, 2
    %v2518 = vadd.f32 %v2516, %v2517
    %v2519 = vrot.slane %v2518, 1
    %v2520 = vadd.f32 %v2518, %v2519
    %v2521 = vadd.f32 %v1949, %v1951
    %v2522 = vrot.slane %v2521, 4
    %v2523 = vadd.f32 %v2521, %v2522
    %v2524 = vrot.slane %v2523, 2
    %v2525 = vadd.f32 %v2523, %v2524
    %v2526 = vrot.slane %v2525, 1
    %v2527 = vadd.f32 %v2525, %v2526
    %v2528 = vmul.f32 %v1924, %v2520
    %v2529 = vmul.f32 %v1925, %v2527
    %v2530 = vmul.f32 %v1926, %v2520
    %v2531 = vmul.f32 %v1927, %v2527
    %2532 = vmatprep.subr.mxu0 %v110
    %2533 = vmatpush1.msra.mxu0 %v109
    %2534 = vmatprep.subr.mxu0 %v112
    %2535 = vmatpush1.msra.mxu0 %v111
    %2536 = vmatprep.subr.mxu0 %v114
    %2537 = vmatpush1.msra.mxu0 %v113
    %2538 = vmatprep.subr.mxu0 %v116
    %2539 = vmatpush1.msra.mxu0 %v115
    %2540 = vmatprep.subr.mxu0 %v118
    %2541 = vmatpush1.msra.mxu0 %v117
    %2542 = vmatprep.subr.mxu0 %v120
    %2543 = vmatpush1.msra.mxu0 %v119
    %2544 = vmatprep.subr.mxu0 %v122
    %2545 = vmatpush1.msra.mxu0 %v121
    %2546 = vmatprep.subr.mxu0 %v124
    %2547 = vmatpush1.msra.mxu0 %v123
    %2548 = vmatprep.subr.mxu0 %v126
    %2549 = vmatpush1.msra.mxu0 %v125
    %2550 = vmatprep.subr.mxu0 %v128
    %2551 = vmatpush1.msra.mxu0 %v127
    %2552 = vmatprep.subr.mxu0 %v130
    %2553 = vmatpush1.msra.mxu0 %v129
    %2554 = vmatprep.subr.mxu0 %v132
    %2555 = vmatpush1.msra.mxu0 %v131
    %2556 = vmatprep.subr.mxu0 %v134
    %2557 = vmatpush1.msra.mxu0 %v133
    %2558 = vmatprep.subr.mxu0 %v136
    %2559 = vmatpush1.msra.mxu0 %v135
    %2560 = vmatprep.subr.mxu0 %v138
    %2561 = vmatpush1.msra.mxu0 %v137
    %2562 = vmatprep.subr.mxu0 %v140
    %2563 = vmatpush1.msra.mxu0 %v139
    %2564 = vmatprep.subr.mxu0 %v142
    %2565 = vmatpush1.msra.mxu0 %v141
    %2566 = vmatprep.subr.mxu0 %v144
    %2567 = vmatpush1.msra.mxu0 %v143
    %2568 = vmatprep.subr.mxu0 %v146
    %2569 = vmatpush1.msra.mxu0 %v145
    %2570 = vmatprep.subr.mxu0 %v148
    %2571 = vmatpush1.msra.mxu0 %v147
    %2572 = vmatprep.subr.mxu0 %v150
    %2573 = vmatpush1.msra.mxu0 %v149
    %2574 = vmatprep.subr.mxu0 %v152
    %2575 = vmatpush1.msra.mxu0 %v151
    %2576 = vmatprep.subr.mxu0 %v154
    %2577 = vmatpush1.msra.mxu0 %v153
    %2578 = vmatprep.subr.mxu0 %v156
    %2579 = vmatpush1.msra.mxu0 %v155
    %2580 = vmatprep.subr.mxu0 %v158
    %2581 = vmatpush1.msra.mxu0 %v157
    %2582 = vmatprep.subr.mxu0 %v160
    %2583 = vmatpush1.msra.mxu0 %v159
    %2584 = vmatprep.subr.mxu0 %v162
    %2585 = vmatpush1.msra.mxu0 %v161
    %2586 = vmatprep.subr.mxu0 %v164
    %2587 = vmatpush1.msra.mxu0 %v163
    %2588 = vmatprep.subr.mxu0 %v166
    %2589 = vmatpush1.msra.mxu0 %v165
    %2590 = vmatprep.subr.mxu0 %v168
    %2591 = vmatpush1.msra.mxu0 %v167
    %2592 = vmatprep.subr.mxu0 %v170
    %2593 = vmatpush1.msra.mxu0 %v169
    %2594 = vmatprep.subr.mxu0 %v172
    %2595 = vmatpush1.msra.mxu0 %v171
    %2596 = vmatprep.mubr.f32.mxu0 %v2529
    %2597 = vmatmul.mubr.f32.gmra.mrb[0].mxu0 %v2528
    %v2598 = vpop.f32.mrb[0].mxu0
    %v2599 = vadd.f32 16.0, %v2598
    %v2600 = vpop.f32.mrb[0].mxu0
    %v2601 = vadd.f32 16.0, %v2600
    %2602 = vmatprep.mubr.f32.mxu0 %v2531
    %2603 = vmatmul.mubr.f32.gmra.mrb[0].mxu0 %v2530
    %v2604 = vpop.f32.mrb[0].mxu0
    %v2605 = vadd.f32 16.0, %v2604
    %v2606 = vpop.f32.mrb[0].mxu0
    %v2607 = vadd.f32 16.0, %v2606
    %2608 = vdwg.mxu0
    %v2609 = vrcp.pop %v2599
    %v2610 = vrcp.pop %v2601
    %v2611 = vrcp.pop %v2605
    %v2612 = vrcp.pop %v2607
    %v2613 = vmul.f32 %v2504, %v2609
    %v2614 = vmul.f32 %v2506, %v2610
    %v2615 = vmul.f32 %v2510, %v2611
    %v2616 = vmul.f32 %v2512, %v2612
    %v2617 = vmul.f32 %v1541, 0.5
    %v2618 = vmul.f32 %v1542, 0.5
    %2619 = vmatprep.subr.mxu0 0.0
    %2620 = vmatpush1.msra.mxu0 %v173
    %2621 = vmatprep.subr.mxu0 0.0
    %2622 = vmatpush1.msra.mxu0 %v174
    %2623 = vmatprep.subr.mxu0 0.0
    %2624 = vmatpush1.msra.mxu0 %v175
    %2625 = vmatprep.subr.mxu0 0.0
    %2626 = vmatpush1.msra.mxu0 %v176
    %2627 = vmatprep.subr.mxu0 0.0
    %2628 = vmatpush1.msra.mxu0 %v177
    %2629 = vmatprep.subr.mxu0 0.0
    %2630 = vmatpush1.msra.mxu0 %v178
    %2631 = vmatprep.subr.mxu0 0.0
    %2632 = vmatpush1.msra.mxu0 %v179
    %2633 = vmatprep.subr.mxu0 0.0
    %2634 = vmatpush1.msra.mxu0 %v180
    %2635 = vmatprep.subr.mxu0 0.0
    %2636 = vmatpush1.msra.mxu0 %v181
    %2637 = vmatprep.subr.mxu0 0.0
    %2638 = vmatpush1.msra.mxu0 %v182
    %2639 = vmatprep.subr.mxu0 0.0
    %2640 = vmatpush1.msra.mxu0 %v183
    %2641 = vmatprep.subr.mxu0 0.0
    %2642 = vmatpush1.msra.mxu0 %v184
    %2643 = vmatprep.subr.mxu0 0.0
    %2644 = vmatpush1.msra.mxu0 %v185
    %2645 = vmatprep.subr.mxu0 0.0
    %2646 = vmatpush1.msra.mxu0 %v186
    %2647 = vmatprep.subr.mxu0 0.0
    %2648 = vmatpush1.msra.mxu0 %v187
    %2649 = vmatprep.subr.mxu0 0.0
    %2650 = vmatpush1.msra.mxu0 %v188
    %2651 = vmatprep.subr.mxu0 0.0
    %2652 = vmatpush1.msra.mxu0 %v189
    %2653 = vmatprep.subr.mxu0 0.0
    %2654 = vmatpush1.msra.mxu0 %v190
    %2655 = vmatprep.subr.mxu0 0.0
    %2656 = vmatpush1.msra.mxu0 %v191
    %2657 = vmatprep.subr.mxu0 0.0
    %2658 = vmatpush1.msra.mxu0 %v192
    %2659 = vmatprep.subr.mxu0 0.0
    %2660 = vmatpush1.msra.mxu0 %v193
    %2661 = vmatprep.subr.mxu0 0.0
    %2662 = vmatpush1.msra.mxu0 %v194
    %2663 = vmatprep.subr.mxu0 0.0
    %2664 = vmatpush1.msra.mxu0 %v195
    %2665 = vmatprep.subr.mxu0 0.0
    %2666 = vmatpush1.msra.mxu0 %v196
    %2667 = vmatprep.subr.mxu0 0.0
    %2668 = vmatpush1.msra.mxu0 %v197
    %2669 = vmatprep.subr.mxu0 0.0
    %2670 = vmatpush1.msra.mxu0 %v198
    %2671 = vmatprep.subr.mxu0 0.0
    %2672 = vmatpush1.msra.mxu0 %v199
    %2673 = vmatprep.subr.mxu0 0.0
    %2674 = vmatpush1.msra.mxu0 %v200
    %2675 = vmatprep.subr.mxu0 0.0
    %2676 = vmatpush1.msra.mxu0 %v201
    %2677 = vmatprep.subr.mxu0 0.0
    %2678 = vmatpush1.msra.mxu0 %v202
    %2679 = vmatprep.subr.mxu0 0.0
    %2680 = vmatpush1.msra.mxu0 %v203
    %2681 = vmatprep.subr.mxu0 0.0
    %2682 = vmatpush1.msra.mxu0 %v204
    %2683 = vmatprep.mubr.f32.mxu0 %v2614
    %2684 = vmatmul.mubr.f32.gmra.mrb[0].mxu0 %v2613
    %v2685 = vpop.f32.mrb[0].mxu0
    %v2686 = vadd.f32 %v2617, %v2685
    %v2687 = vpop.f32.mrb[0].mxu0
    %2688 = vmatprep.mubr.f32.mxu0 %v2616
    %2689 = vmatmul.mubr.f32.gmra.mrb[0].mxu0 %v2615
    %v2690 = vpop.f32.mrb[0].mxu0
    %v2691 = vadd.f32 %v2618, %v2690
    %v2692 = vpop.f32.mrb[0].mxu0
    %2693 = vdwg.mxu0
    %s2694 = scalar_lea.vmem %s7, 1
    %v2695 = vld [vmem:[%s2694] sm:$0x1]
    %s2696 = scalar_lea.vmem %s8, 1
    %v2697 = vld [vmem:[%s2696] sm:$0x1]
    %2698 = vadd.xlane.f32.xlu0 %v2686
    %v2699 = vpop.xlane.xlu0 %2698
    %2700 = vadd.xlane.f32.xlu0 %v2691
    %v2701 = vpop.xlane.xlu0 %2700
    %v2702 = vmul.f32 %v2699, 0.03125
    %v2703 = vmul.f32 %v2701, 0.03125
    %v2704 = vmul.f32 %v2686, %v2686
    %v2705 = vmul.f32 %v2691, %v2691
    %2706 = vadd.xlane.f32.xlu0 %v2704
    %v2707 = vpop.xlane.xlu0 %2706
    %2708 = vadd.xlane.f32.xlu0 %v2705
    %v2709 = vpop.xlane.xlu0 %2708
    %v2710 = vmul.f32 %v2707, 0.03125
    %v2711 = vmul.f32 %v2709, 0.03125
    %v2712 = vmul.f32 %v2702, %v2702
    %v2713 = vmul.f32 %v2703, %v2703
    %v2714 = vsub.f32 %v2710, %v2712
    %v2715 = vsub.f32 %v2711, %v2713
    %v2716 = vsub.f32 %v2686, %v2702
    %v2717 = vsub.f32 %v2691, %v2703
    %v2718 = vadd.f32 %v2714, 1e-05
    %v2719 = vadd.f32 %v2715, 1e-05
    %v2720 = vrsqrt.pop %v2718
    %v2721 = vrsqrt.pop %v2719
    %v2722 = vmul.f32 %v2716, %v2720
    %v2723 = vmul.f32 %v2717, %v2721
    %v2725 = vlaneseq
    %v2726 = vshrl.u32 %v2725, 7
    %v2727 = vsub.s32 0, %v2726
    %v2728 = vrot.slane %v2695, %v2727
    %v2730 = vmul.f32 %v2722, %v2728
    %v2731 = vmul.f32 %v2723, %v2728
    %v2733 = vlaneseq
    %v2734 = vshrl.u32 %v2733, 7
    %v2735 = vsub.s32 0, %v2734
    %v2736 = vrot.slane %v2697, %v2735
    %v2738 = vadd.f32 %v2730, %v2736
    %v2739 = vadd.f32 %v2731, %v2736
    %2740 = vst [vmem:[#allocation11] sm:$0xff] %v2738
    %2741 = vst [vmem:[#allocation11 + $0x8] sm:$0xff] %v2739
    // Predicated region
    $region66: #{tpu_custom_call.1} parent=1 // pred_check
      _
    $region67: #{tpu_custom_call.1} parent=1 // pred_check_branch
      %2743 = sbr.rel (0) target = $region69
    $region68: #{tpu_custom_call.1} parent=1 // pred_region
      %s2745 = ssub.s32 256, 256
      %2746 = vsyncadd [#allocation4], %s2745
      %s2747 = sshll.u32 [#allocation11], 4
      %s2748 = int_to_ptr.vmem [resolvable:$true] %s2747
      %2753 = dma.vmem_to_hbm [thread:$0]  %s2748, 256, %s11, [#allocation4], 128, 128, 8
    $region69: #{tpu_custom_call.1} parent=1 // pred_fallthru
      _
    // Predicated region
    $region70: #{tpu_custom_call.1} parent=1 // pred_check
      _
    $region71: #{tpu_custom_call.1} parent=1 // pred_check_branch
      %2755 = sbr.rel (0) target = $region73
    $region72: #{tpu_custom_call.1} parent=1 // pred_region
      %2756 = dma.done [#allocation4], 256
    $region73: #{tpu_custom_call.1} parent=1 // pred_fallthru
      _
    %2757 = vsyncpa [#allocation3], 1
    %2758 = vsyncpa [#allocation6], 1
    %2759 = vsyncpa [#allocation9], 1
    %2760 = vsyncpa [#allocation4], 1

</llo_original>
